<compile_context>
chip_gen: v5e
topology: v5e:2x2
jax: 0.10.0
libtpu: 0.0.40
codegen_flags: <defaults>
</compile_context>

<pallas_src>
import functools

import jax
import jax.numpy as jnp
from jax.experimental import pallas as pl
from jax.experimental.pallas import tpu as pltpu

# ---------------- synthetic BERT config (small) ----------------
VOCAB = 100
HIDDEN = 32
LAYERS = 2
HEADS = 4
HEAD_DIM = HIDDEN // HEADS
INTERMEDIATE = 64
MAX_POS = 16
TYPE_VOCAB = 2
EPS = 1e-12  # BERT LayerNorm eps

# ---------------- packed-slab layout constants ----------------
EMB_ROWS = VOCAB + MAX_POS + 1          # word rows | pos rows | type-0 row
VEC_W = 3 * HIDDEN                      # widest row vector (bqkv)
VEC_ROWS = 2 + 8 * LAYERS + 1           # emb_ln(2) + 8 rows/layer + pool_b
WA_QKV = 0                              # [H, 3H]  fused q|k|v (scale folded)
WA_WO = 3 * HIDDEN                      # [H, H]   attn output proj
WA_WI = 4 * HIDDEN                      # [H, INT] FFN in
WA_PW = 4 * HIDDEN + INTERMEDIATE       # [H, H]   pooler weight (layer 0 only)
WA_W = WA_PW + HIDDEN                   # 224 columns


# ---------------- in-kernel helpers (traced inside the kernel) -------------
def _layernorm(x, g, b):
    mu = jnp.mean(x, axis=-1, keepdims=True)
    var = jnp.mean((x - mu) * (x - mu), axis=-1, keepdims=True)
    return (x - mu) * jax.lax.rsqrt(var + EPS) * g + b


def _gelu(y):
    # TODO(synk): HF BERT uses exact erf-GELU; tanh approximation used here.
    c = jnp.float32(0.7978845608028654)  # sqrt(2/pi)
    return 0.5 * y * (1.0 + jnp.tanh(c * (y + 0.044715 * y * y * y)))


# ---------------- the single fused Pallas kernel ----------------
def _bert_fused_kernel(tok_ref, emb_ref, vec_ref, wa_ref, wb_ref, o_ref,
                       xbuf_ref, ctx_ref, *, batch, seq):
    H, DH = HIDDEN, HEAD_DIM

    # ---- embeddings: in-kernel word-row gather + position/type adds ----
    # TODO(synk): no attention mask; token_type_ids hard-coded to type 0
    # (matches the synthetic all-valid, single-segment input).
    for b in range(batch):
        for s in range(seq):
            tok = tok_ref[b, s]                                     # SMEM scalar
            xbuf_ref[b * seq + s:b * seq + s + 1, :] = emb_ref[pl.ds(tok, 1), :]
    pos_type = (emb_ref[VOCAB:VOCAB + seq, :]                        # [S, H]
                + emb_ref[VOCAB + MAX_POS:VOCAB + MAX_POS + 1, :])
    x = xbuf_ref[...] + jnp.concatenate([pos_type] * batch, axis=0)  # [B*S, H]
    h = _layernorm(x, vec_ref[0:1, :H], vec_ref[1:2, :H])

    for l in range(LAYERS):                 # static unroll over layers
        base = 2 + 8 * l
        wa_l = wa_ref[l]                                            # [H, WA_W]
        wqkv = wa_l[:, WA_QKV:WA_QKV + 3 * H]
        wo = wa_l[:, WA_WO:WA_WO + H]
        wi = wa_l[:, WA_WI:WA_WI + INTERMEDIATE]
        wo2 = wb_ref[l]                                             # [INT, H]

        # ---- fused Q/K/V projection (1/sqrt(dh) folded into Q cols/bias) ----
        qkv = (jnp.dot(h, wqkv, preferred_element_type=jnp.float32)
               + vec_ref[base:base + 1, :3 * H])                    # [B*S, 3H]

        # ---- multi-head attention: per head, one batched dot over B for the
        #      scores and one for the context (instead of B*HEADS tiny dots);
        #      per-head contexts stored into scratch at static lane offsets. ----
        for hd in range(HEADS):
            c = hd * DH
            qh = qkv[:, c:c + DH].reshape(batch, seq, DH)
            kh = qkv[:, H + c:H + c + DH].reshape(batch, seq, DH)
            vh = qkv[:, 2 * H + c:2 * H + c + DH].reshape(batch, seq, DH)
            sc = jnp.einsum("bqd,bkd->bqk", qh, kh,
                            preferred_element_type=jnp.float32)     # [B, S, S]
            sc = sc - jnp.max(sc, axis=-1, keepdims=True)
            p = jnp.exp(sc)
            # NOTE: approx reciprocal (EUP); rows sum to ~1 within tiny rel err.
            p = p * pl.reciprocal(jnp.sum(p, axis=-1, keepdims=True),
                                  approx=True)
            ctx_h = jnp.einsum("bqk,bkd->bqd", p, vh,
                               preferred_element_type=jnp.float32)  # [B, S, DH]
            ctx_ref[:, c:c + DH] = ctx_h.reshape(batch * seq, DH)

        # ---- attention output projection + residual + layernorm ----
        attn = (jnp.dot(ctx_ref[...], wo, preferred_element_type=jnp.float32)
                + vec_ref[base + 1:base + 2, :H])
        h = _layernorm(attn + h, vec_ref[base + 2:base + 3, :H],
                       vec_ref[base + 3:base + 4, :H])

        # ---- FFN (GELU) + residual + layernorm ----
        inter = _gelu(jnp.dot(h, wi, preferred_element_type=jnp.float32)
                      + vec_ref[base + 4:base + 5, :INTERMEDIATE])
        ff = (jnp.dot(inter, wo2, preferred_element_type=jnp.float32)
              + vec_ref[base + 5:base + 6, :H])
        h = _layernorm(ff + h, vec_ref[base + 6:base + 7, :H],
                       vec_ref[base + 7:base + 8, :H])

    # ---- pooler: tanh(W @ h[:, 0] + b) over the CLS rows ----
    cls = jnp.concatenate([h[b * seq:b * seq + 1, :] for b in range(batch)],
                          axis=0)                                   # [B, H]
    pw = wa_ref[0][:, WA_PW:WA_PW + H]
    pb = vec_ref[2 + 8 * LAYERS:2 + 8 * LAYERS + 1, :H]
    o_ref[...] = jnp.tanh(
        jnp.dot(cls, pw, preferred_element_type=jnp.float32) + pb
    ).astype(o_ref.dtype)


# ---------------- parameters (deterministic, synthetic) ----------------
def init_params(key):
    keys = iter(jax.random.split(key, 64))

    def nrm(shape):
        return 0.02 * jax.random.normal(next(keys), shape, jnp.float32)

    return {
        "word_emb": nrm((VOCAB, HIDDEN)),
        "pos_emb": nrm((MAX_POS, HIDDEN)),
        "type_emb": nrm((TYPE_VOCAB, HIDDEN)),
        "emb_ln_g": jnp.ones((1, HIDDEN), jnp.float32),
        "emb_ln_b": jnp.zeros((1, HIDDEN), jnp.float32),
        "wqkv": nrm((LAYERS, HIDDEN, 3 * HIDDEN)),
        "bqkv": jnp.zeros((LAYERS, 1, 3 * HIDDEN), jnp.float32),
        "wo": nrm((LAYERS, HIDDEN, HIDDEN)),
        "bo": jnp.zeros((LAYERS, 1, HIDDEN), jnp.float32),
        "attn_ln_g": jnp.ones((LAYERS, 1, HIDDEN), jnp.float32),
        "attn_ln_b": jnp.zeros((LAYERS, 1, HIDDEN), jnp.float32),
        "wi": nrm((LAYERS, HIDDEN, INTERMEDIATE)),
        "bi": jnp.zeros((LAYERS, 1, INTERMEDIATE), jnp.float32),
        "wo2": nrm((LAYERS, INTERMEDIATE, HIDDEN)),
        "bo2": jnp.zeros((LAYERS, 1, HIDDEN), jnp.float32),
        "out_ln_g": jnp.ones((LAYERS, 1, HIDDEN), jnp.float32),
        "out_ln_b": jnp.zeros((LAYERS, 1, HIDDEN), jnp.float32),
        "pool_w": nrm((HIDDEN, HIDDEN)),
        "pool_b": jnp.zeros((1, HIDDEN), jnp.float32),
    }


def pack_params(params):
    """One-time host-side packing into 4 slabs; folds 1/sqrt(dh) into Q."""
    scale = jnp.float32(1.0 / (HEAD_DIM ** 0.5))

    emb = jnp.concatenate(
        [params["word_emb"], params["pos_emb"], params["type_emb"][0:1]], axis=0)

    def pad_row(v):  # [1, w] -> [1, VEC_W]
        return jnp.pad(v, ((0, 0), (0, VEC_W - v.shape[1])))

    bqkv = params["bqkv"].at[:, :, :HIDDEN].multiply(scale)
    rows = [pad_row(params["emb_ln_g"]), pad_row(params["emb_ln_b"])]
    for l in range(LAYERS):
        rows += [pad_row(bqkv[l]), pad_row(params["bo"][l]),
                 pad_row(params["attn_ln_g"][l]), pad_row(params["attn_ln_b"][l]),
                 pad_row(params["bi"][l]), pad_row(params["bo2"][l]),
                 pad_row(params["out_ln_g"][l]), pad_row(params["out_ln_b"][l])]
    rows.append(pad_row(params["pool_b"]))
    vec = jnp.concatenate(rows, axis=0)

    wqkv = params["wqkv"].at[:, :, :HIDDEN].multiply(scale)
    pool_w = jnp.concatenate(
        [params["pool_w"][None],
         jnp.zeros((LAYERS - 1, HIDDEN, HIDDEN), jnp.float32)], axis=0)
    wa = jnp.concatenate([wqkv, params["wo"], params["wi"], pool_w], axis=2)
    wb = params["wo2"]

    assert emb.shape == (EMB_ROWS, HIDDEN)
    assert vec.shape == (VEC_ROWS, VEC_W)
    assert wa.shape == (LAYERS, HIDDEN, WA_W)
    assert wb.shape == (LAYERS, INTERMEDIATE, HIDDEN)
    return emb, vec, wa, wb


# ---------------- BertPre1.forward equivalent ----------------
@jax.jit
def bert_pre1_forward(packed, sent):
    """sent: [B, S] int32 token ids -> pooler_output [B, HIDDEN] float32."""
    emb, vec, wa, wb = packed
    B, S = sent.shape

    kernel = functools.partial(_bert_fused_kernel, batch=B, seq=S)
    grid_spec = pltpu.PrefetchScalarGridSpec(
        num_scalar_prefetch=1,            # token ids -> SMEM, gathered in-kernel
        grid=(1,),
        in_specs=[
            pl.BlockSpec(emb.shape, lambda i, tok: (0, 0)),
            pl.BlockSpec(vec.shape, lambda i, tok: (0, 0)),
            pl.BlockSpec(wa.shape, lambda i, tok: (0, 0, 0)),
            pl.BlockSpec(wb.shape, lambda i, tok: (0, 0, 0)),
        ],
        out_specs=pl.BlockSpec((B, HIDDEN), lambda i, tok: (0, 0)),
        scratch_shapes=[
            pltpu.VMEM((B * S, HIDDEN), jnp.float32),   # embedding staging
            pltpu.VMEM((B * S, HIDDEN), jnp.float32),   # per-head context slab
        ],
    )
    return pl.pallas_call(
        kernel,
        out_shape=jax.ShapeDtypeStruct((B, HIDDEN), jnp.float32),
        grid_spec=grid_spec,
        compiler_params=pltpu.CompilerParams(
            dimension_semantics=("arbitrary",)),
    )(sent, emb, vec, wa, wb)


if __name__ == "__main__":
    key = jax.random.PRNGKey(0)
    pkey, ikey = jax.random.split(key)
    params = init_params(pkey)
    packed = pack_params(params)

    B, S = 2, 8
    sent = jax.random.randint(ikey, (B, S), 0, VOCAB, dtype=jnp.int32)

    out = bert_pre1_forward(packed, sent)
    out = jax.block_until_ready(out)
    assert out.shape == (B, HIDDEN) and out.dtype == jnp.float32
    assert bool(jnp.isfinite(out).all())
    print("KERNEL_OK")
</pallas_src>

<mosaic_0001>
module attributes {stable_mosaic.version = 11 : i64} {
  func.func @_bert_fused_kernel(%arg0: i32, %arg1: memref<2x8xi32, #tpu.memory_space<smem>>, %arg2: memref<117x32xf32, #tpu.memory_space<vmem>>, %arg3: memref<19x96xf32, #tpu.memory_space<vmem>>, %arg4: memref<2x32x224xf32, #tpu.memory_space<vmem>>, %arg5: memref<2x64x32xf32, #tpu.memory_space<vmem>>, %arg6: memref<2x32xf32, #tpu.memory_space<vmem>>, %arg7: memref<16x32xf32, #tpu.memory_space<vmem>>, %arg8: memref<16x32xf32, #tpu.memory_space<vmem>>) attributes {dimension_semantics = [#tpu.dimension_semantics<arbitrary>], iteration_bounds = array<i64: 1>, scalar_prefetch = 1 : i64, scratch_operands = 2 : i64, tpu.core_type = #tpu.core_type<tc>, window_params = [{pipeline_mode = #tpu.pipeline_mode<synchronous>, transform_indices = @transform_0, window_bounds = array<i64: 117, 32>}, {pipeline_mode = #tpu.pipeline_mode<synchronous>, transform_indices = @transform_1, window_bounds = array<i64: 19, 96>}, {pipeline_mode = #tpu.pipeline_mode<synchronous>, transform_indices = @transform_2, window_bounds = array<i64: 2, 32, 224>}, {pipeline_mode = #tpu.pipeline_mode<synchronous>, transform_indices = @transform_3, window_bounds = array<i64: 2, 64, 32>}, {pipeline_mode = #tpu.pipeline_mode<synchronous>, transform_indices = @transform_4, window_bounds = array<i64: 2, 32>}]} {
    %c0 = arith.constant 0 : index
    %c0_0 = arith.constant 0 : index
    %0 = memref.load %arg1[%c0, %c0_0] : memref<2x8xi32, #tpu.memory_space<smem>>
    %1 = arith.index_cast %0 : i32 to index
    %c0_1 = arith.constant 0 : index
    %2 = vector.load %arg2[%1, %c0_1] : memref<117x32xf32, #tpu.memory_space<vmem>>, vector<1x32xf32>
    %c0_2 = arith.constant 0 : index
    %c0_3 = arith.constant 0 : index
    %3 = vector.load %arg7[%c0_2, %c0_3] : memref<16x32xf32, #tpu.memory_space<vmem>>, vector<1x32xf32>
    tpu.vector_store %arg7[%c0_2, %c0_3], %2 {strides = array<i32>} : memref<16x32xf32, #tpu.memory_space<vmem>>, vector<1x32xf32>,
    %c0_4 = arith.constant 0 : index
    %c1 = arith.constant 1 : index
    %4 = memref.load %arg1[%c0_4, %c1] : memref<2x8xi32, #tpu.memory_space<smem>>
    %5 = arith.index_cast %4 : i32 to index
    %c0_5 = arith.constant 0 : index
    %6 = vector.load %arg2[%5, %c0_5] : memref<117x32xf32, #tpu.memory_space<vmem>>, vector<1x32xf32>
    %c1_6 = arith.constant 1 : index
    %c0_7 = arith.constant 0 : index
    %7 = vector.load %arg7[%c1_6, %c0_7] : memref<16x32xf32, #tpu.memory_space<vmem>>, vector<1x32xf32>
    tpu.vector_store %arg7[%c1_6, %c0_7], %6 {strides = array<i32>} : memref<16x32xf32, #tpu.memory_space<vmem>>, vector<1x32xf32>,
    %c0_8 = arith.constant 0 : index
    %c2 = arith.constant 2 : index
    %8 = memref.load %arg1[%c0_8, %c2] : memref<2x8xi32, #tpu.memory_space<smem>>
    %9 = arith.index_cast %8 : i32 to index
    %c0_9 = arith.constant 0 : index
    %10 = vector.load %arg2[%9, %c0_9] : memref<117x32xf32, #tpu.memory_space<vmem>>, vector<1x32xf32>
    %c2_10 = arith.constant 2 : index
    %c0_11 = arith.constant 0 : index
    %11 = vector.load %arg7[%c2_10, %c0_11] : memref<16x32xf32, #tpu.memory_space<vmem>>, vector<1x32xf32>
    tpu.vector_store %arg7[%c2_10, %c0_11], %10 {strides = array<i32>} : memref<16x32xf32, #tpu.memory_space<vmem>>, vector<1x32xf32>,
    %c0_12 = arith.constant 0 : index
    %c3 = arith.constant 3 : index
    %12 = memref.load %arg1[%c0_12, %c3] : memref<2x8xi32, #tpu.memory_space<smem>>
    %13 = arith.index_cast %12 : i32 to index
    %c0_13 = arith.constant 0 : index
    %14 = vector.load %arg2[%13, %c0_13] : memref<117x32xf32, #tpu.memory_space<vmem>>, vector<1x32xf32>
    %c3_14 = arith.constant 3 : index
    %c0_15 = arith.constant 0 : index
    %15 = vector.load %arg7[%c3_14, %c0_15] : memref<16x32xf32, #tpu.memory_space<vmem>>, vector<1x32xf32>
    tpu.vector_store %arg7[%c3_14, %c0_15], %14 {strides = array<i32>} : memref<16x32xf32, #tpu.memory_space<vmem>>, vector<1x32xf32>,
    %c0_16 = arith.constant 0 : index
    %c4 = arith.constant 4 : index
    %16 = memref.load %arg1[%c0_16, %c4] : memref<2x8xi32, #tpu.memory_space<smem>>
    %17 = arith.index_cast %16 : i32 to index
    %c0_17 = arith.constant 0 : index
    %18 = vector.load %arg2[%17, %c0_17] : memref<117x32xf32, #tpu.memory_space<vmem>>, vector<1x32xf32>
    %c4_18 = arith.constant 4 : index
    %c0_19 = arith.constant 0 : index
    %19 = vector.load %arg7[%c4_18, %c0_19] : memref<16x32xf32, #tpu.memory_space<vmem>>, vector<1x32xf32>
    tpu.vector_store %arg7[%c4_18, %c0_19], %18 {strides = array<i32>} : memref<16x32xf32, #tpu.memory_space<vmem>>, vector<1x32xf32>,
    %c0_20 = arith.constant 0 : index
    %c5 = arith.constant 5 : index
    %20 = memref.load %arg1[%c0_20, %c5] : memref<2x8xi32, #tpu.memory_space<smem>>
    %21 = arith.index_cast %20 : i32 to index
    %c0_21 = arith.constant 0 : index
    %22 = vector.load %arg2[%21, %c0_21] : memref<117x32xf32, #tpu.memory_space<vmem>>, vector<1x32xf32>
    %c5_22 = arith.constant 5 : index
    %c0_23 = arith.constant 0 : index
    %23 = vector.load %arg7[%c5_22, %c0_23] : memref<16x32xf32, #tpu.memory_space<vmem>>, vector<1x32xf32>
    tpu.vector_store %arg7[%c5_22, %c0_23], %22 {strides = array<i32>} : memref<16x32xf32, #tpu.memory_space<vmem>>, vector<1x32xf32>,
    %c0_24 = arith.constant 0 : index
    %c6 = arith.constant 6 : index
    %24 = memref.load %arg1[%c0_24, %c6] : memref<2x8xi32, #tpu.memory_space<smem>>
    %25 = arith.index_cast %24 : i32 to index
    %c0_25 = arith.constant 0 : index
    %26 = vector.load %arg2[%25, %c0_25] : memref<117x32xf32, #tpu.memory_space<vmem>>, vector<1x32xf32>
    %c6_26 = arith.constant 6 : index
    %c0_27 = arith.constant 0 : index
    %27 = vector.load %arg7[%c6_26, %c0_27] : memref<16x32xf32, #tpu.memory_space<vmem>>, vector<1x32xf32>
    tpu.vector_store %arg7[%c6_26, %c0_27], %26 {strides = array<i32>} : memref<16x32xf32, #tpu.memory_space<vmem>>, vector<1x32xf32>,
    %c0_28 = arith.constant 0 : index
    %c7 = arith.constant 7 : index
    %28 = memref.load %arg1[%c0_28, %c7] : memref<2x8xi32, #tpu.memory_space<smem>>
    %29 = arith.index_cast %28 : i32 to index
    %c0_29 = arith.constant 0 : index
    %30 = vector.load %arg2[%29, %c0_29] : memref<117x32xf32, #tpu.memory_space<vmem>>, vector<1x32xf32>
    %c7_30 = arith.constant 7 : index
    %c0_31 = arith.constant 0 : index
    %31 = vector.load %arg7[%c7_30, %c0_31] : memref<16x32xf32, #tpu.memory_space<vmem>>, vector<1x32xf32>
    tpu.vector_store %arg7[%c7_30, %c0_31], %30 {strides = array<i32>} : memref<16x32xf32, #tpu.memory_space<vmem>>, vector<1x32xf32>,
    %c1_32 = arith.constant 1 : index
    %c0_33 = arith.constant 0 : index
    %32 = memref.load %arg1[%c1_32, %c0_33] : memref<2x8xi32, #tpu.memory_space<smem>>
    %33 = arith.index_cast %32 : i32 to index
    %c0_34 = arith.constant 0 : index
    %34 = vector.load %arg2[%33, %c0_34] : memref<117x32xf32, #tpu.memory_space<vmem>>, vector<1x32xf32>
    %c8 = arith.constant 8 : index
    %c0_35 = arith.constant 0 : index
    %35 = vector.load %arg7[%c8, %c0_35] : memref<16x32xf32, #tpu.memory_space<vmem>>, vector<1x32xf32>
    tpu.vector_store %arg7[%c8, %c0_35], %34 {strides = array<i32>} : memref<16x32xf32, #tpu.memory_space<vmem>>, vector<1x32xf32>,
    %c1_36 = arith.constant 1 : index
    %c1_37 = arith.constant 1 : index
    %36 = memref.load %arg1[%c1_36, %c1_37] : memref<2x8xi32, #tpu.memory_space<smem>>
    %37 = arith.index_cast %36 : i32 to index
    %c0_38 = arith.constant 0 : index
    %38 = vector.load %arg2[%37, %c0_38] : memref<117x32xf32, #tpu.memory_space<vmem>>, vector<1x32xf32>
    %c9 = arith.constant 9 : index
    %c0_39 = arith.constant 0 : index
    %39 = vector.load %arg7[%c9, %c0_39] : memref<16x32xf32, #tpu.memory_space<vmem>>, vector<1x32xf32>
    tpu.vector_store %arg7[%c9, %c0_39], %38 {strides = array<i32>} : memref<16x32xf32, #tpu.memory_space<vmem>>, vector<1x32xf32>,
    %c1_40 = arith.constant 1 : index
    %c2_41 = arith.constant 2 : index
    %40 = memref.load %arg1[%c1_40, %c2_41] : memref<2x8xi32, #tpu.memory_space<smem>>
    %41 = arith.index_cast %40 : i32 to index
    %c0_42 = arith.constant 0 : index
    %42 = vector.load %arg2[%41, %c0_42] : memref<117x32xf32, #tpu.memory_space<vmem>>, vector<1x32xf32>
    %c10 = arith.constant 10 : index
    %c0_43 = arith.constant 0 : index
    %43 = vector.load %arg7[%c10, %c0_43] : memref<16x32xf32, #tpu.memory_space<vmem>>, vector<1x32xf32>
    tpu.vector_store %arg7[%c10, %c0_43], %42 {strides = array<i32>} : memref<16x32xf32, #tpu.memory_space<vmem>>, vector<1x32xf32>,
    %c1_44 = arith.constant 1 : index
    %c3_45 = arith.constant 3 : index
    %44 = memref.load %arg1[%c1_44, %c3_45] : memref<2x8xi32, #tpu.memory_space<smem>>
    %45 = arith.index_cast %44 : i32 to index
    %c0_46 = arith.constant 0 : index
    %46 = vector.load %arg2[%45, %c0_46] : memref<117x32xf32, #tpu.memory_space<vmem>>, vector<1x32xf32>
    %c11 = arith.constant 11 : index
    %c0_47 = arith.constant 0 : index
    %47 = vector.load %arg7[%c11, %c0_47] : memref<16x32xf32, #tpu.memory_space<vmem>>, vector<1x32xf32>
    tpu.vector_store %arg7[%c11, %c0_47], %46 {strides = array<i32>} : memref<16x32xf32, #tpu.memory_space<vmem>>, vector<1x32xf32>,
    %c1_48 = arith.constant 1 : index
    %c4_49 = arith.constant 4 : index
    %48 = memref.load %arg1[%c1_48, %c4_49] : memref<2x8xi32, #tpu.memory_space<smem>>
    %49 = arith.index_cast %48 : i32 to index
    %c0_50 = arith.constant 0 : index
    %50 = vector.load %arg2[%49, %c0_50] : memref<117x32xf32, #tpu.memory_space<vmem>>, vector<1x32xf32>
    %c12 = arith.constant 12 : index
    %c0_51 = arith.constant 0 : index
    %51 = vector.load %arg7[%c12, %c0_51] : memref<16x32xf32, #tpu.memory_space<vmem>>, vector<1x32xf32>
    tpu.vector_store %arg7[%c12, %c0_51], %50 {strides = array<i32>} : memref<16x32xf32, #tpu.memory_space<vmem>>, vector<1x32xf32>,
    %c1_52 = arith.constant 1 : index
    %c5_53 = arith.constant 5 : index
    %52 = memref.load %arg1[%c1_52, %c5_53] : memref<2x8xi32, #tpu.memory_space<smem>>
    %53 = arith.index_cast %52 : i32 to index
    %c0_54 = arith.constant 0 : index
    %54 = vector.load %arg2[%53, %c0_54] : memref<117x32xf32, #tpu.memory_space<vmem>>, vector<1x32xf32>
    %c13 = arith.constant 13 : index
    %c0_55 = arith.constant 0 : index
    %55 = vector.load %arg7[%c13, %c0_55] : memref<16x32xf32, #tpu.memory_space<vmem>>, vector<1x32xf32>
    tpu.vector_store %arg7[%c13, %c0_55], %54 {strides = array<i32>} : memref<16x32xf32, #tpu.memory_space<vmem>>, vector<1x32xf32>,
    %c1_56 = arith.constant 1 : index
    %c6_57 = arith.constant 6 : index
    %56 = memref.load %arg1[%c1_56, %c6_57] : memref<2x8xi32, #tpu.memory_space<smem>>
    %57 = arith.index_cast %56 : i32 to index
    %c0_58 = arith.constant 0 : index
    %58 = vector.load %arg2[%57, %c0_58] : memref<117x32xf32, #tpu.memory_space<vmem>>, vector<1x32xf32>
    %c14 = arith.constant 14 : index
    %c0_59 = arith.constant 0 : index
    %59 = vector.load %arg7[%c14, %c0_59] : memref<16x32xf32, #tpu.memory_space<vmem>>, vector<1x32xf32>
    tpu.vector_store %arg7[%c14, %c0_59], %58 {strides = array<i32>} : memref<16x32xf32, #tpu.memory_space<vmem>>, vector<1x32xf32>,
    %c1_60 = arith.constant 1 : index
    %c7_61 = arith.constant 7 : index
    %60 = memref.load %arg1[%c1_60, %c7_61] : memref<2x8xi32, #tpu.memory_space<smem>>
    %61 = arith.index_cast %60 : i32 to index
    %c0_62 = arith.constant 0 : index
    %62 = vector.load %arg2[%61, %c0_62] : memref<117x32xf32, #tpu.memory_space<vmem>>, vector<1x32xf32>
    %c15 = arith.constant 15 : index
    %c0_63 = arith.constant 0 : index
    %63 = vector.load %arg7[%c15, %c0_63] : memref<16x32xf32, #tpu.memory_space<vmem>>, vector<1x32xf32>
    tpu.vector_store %arg7[%c15, %c0_63], %62 {strides = array<i32>} : memref<16x32xf32, #tpu.memory_space<vmem>>, vector<1x32xf32>,
    %c100 = arith.constant 100 : index
    %c0_64 = arith.constant 0 : index
    %64 = vector.load %arg2[%c100, %c0_64] : memref<117x32xf32, #tpu.memory_space<vmem>>, vector<8x32xf32>
    %c116 = arith.constant 116 : index
    %c0_65 = arith.constant 0 : index
    %65 = vector.load %arg2[%c116, %c0_65] : memref<117x32xf32, #tpu.memory_space<vmem>>, vector<1x32xf32>
    %66 = vector.broadcast %65 : vector<1x32xf32> to vector<8x32xf32>
    %67 = arith.addf %64, %66 : vector<8x32xf32>
    %c0_66 = arith.constant 0 : index
    %c0_67 = arith.constant 0 : index
    %68 = vector.load %arg7[%c0_66, %c0_67] : memref<16x32xf32, #tpu.memory_space<vmem>>, vector<16x32xf32>
    %69 = tpu.concatenate %67, %67 in 0 : vector<8x32xf32>, vector<8x32xf32> -> vector<16x32xf32>
    %70 = arith.addf %68, %69 : vector<16x32xf32>
    %c0_68 = arith.constant 0 : index
    %c0_69 = arith.constant 0 : index
    %71 = vector.load %arg3[%c0_68, %c0_69] : memref<19x96xf32, #tpu.memory_space<vmem>>, vector<1x32xf32>
    %c1_70 = arith.constant 1 : index
    %c0_71 = arith.constant 0 : index
    %72 = vector.load %arg3[%c1_70, %c0_71] : memref<19x96xf32, #tpu.memory_space<vmem>>, vector<1x32xf32>
    %cst = arith.constant dense<0.000000e+00> : vector<16xf32>
    %73 = vector.multi_reduction <add>, %70, %cst [1] : vector<16x32xf32> to vector<16xf32>
    %74 = vector.shape_cast %73 : vector<16xf32> to vector<16x1xf32>
    %cst_72 = arith.constant 3.200000e+01 : f32
    %75 = vector.broadcast %cst_72 : f32 to vector<16x1xf32>
    %76 = arith.divf %74, %75 : vector<16x1xf32>
    %77 = vector.broadcast %76 : vector<16x1xf32> to vector<16x32xf32>
    %78 = arith.subf %70, %77 : vector<16x32xf32>
    %79 = vector.broadcast %76 : vector<16x1xf32> to vector<16x32xf32>
    %80 = arith.subf %70, %79 : vector<16x32xf32>
    %81 = arith.mulf %78, %80 : vector<16x32xf32>
    %cst_73 = arith.constant dense<0.000000e+00> : vector<16xf32>
    %82 = vector.multi_reduction <add>, %81, %cst_73 [1] : vector<16x32xf32> to vector<16xf32>
    %83 = vector.shape_cast %82 : vector<16xf32> to vector<16x1xf32>
    %cst_74 = arith.constant 3.200000e+01 : f32
    %84 = vector.broadcast %cst_74 : f32 to vector<16x1xf32>
    %85 = arith.divf %83, %84 : vector<16x1xf32>
    %86 = vector.broadcast %76 : vector<16x1xf32> to vector<16x32xf32>
    %87 = arith.subf %70, %86 : vector<16x32xf32>
    %cst_75 = arith.constant 9.99999996E-13 : f32
    %88 = vector.broadcast %cst_75 : f32 to vector<16x1xf32>
    %89 = arith.addf %85, %88 : vector<16x1xf32>
    %90 = math.rsqrt %89 : vector<16x1xf32>
    %91 = vector.broadcast %90 : vector<16x1xf32> to vector<16x32xf32>
    %92 = arith.mulf %87, %91 : vector<16x32xf32>
    %93 = vector.broadcast %71 : vector<1x32xf32> to vector<16x32xf32>
    %94 = arith.mulf %92, %93 : vector<16x32xf32>
    %95 = vector.broadcast %72 : vector<1x32xf32> to vector<16x32xf32>
    %96 = arith.addf %94, %95 : vector<16x32xf32>
    %c0_76 = arith.constant 0 : index
    %c0_77 = arith.constant 0 : index
    %c0_78 = arith.constant 0 : index
    %97 = vector.load %arg4[%c0_76, %c0_77, %c0_78] : memref<2x32x224xf32, #tpu.memory_space<vmem>>, vector<1x32x224xf32>
    %98 = vector.shape_cast %97 : vector<1x32x224xf32> to vector<32x224xf32>
    %99 = vector.extract_strided_slice %98 {offsets = [0, 0], sizes = [32, 96], strides = [1, 1]} : vector<32x224xf32> to vector<32x96xf32>
    %100 = vector.extract_strided_slice %98 {offsets = [0, 96], sizes = [32, 32], strides = [1, 1]} : vector<32x224xf32> to vector<32x32xf32>
    %101 = vector.extract_strided_slice %98 {offsets = [0, 128], sizes = [32, 64], strides = [1, 1]} : vector<32x224xf32> to vector<32x64xf32>
    %c0_79 = arith.constant 0 : index
    %c0_80 = arith.constant 0 : index
    %c0_81 = arith.constant 0 : index
    %102 = vector.load %arg5[%c0_79, %c0_80, %c0_81] : memref<2x64x32xf32, #tpu.memory_space<vmem>>, vector<1x64x32xf32>
    %103 = vector.shape_cast %102 : vector<1x64x32xf32> to vector<64x32xf32>
    %cst_82 = arith.constant dense<0.000000e+00> : vector<16x96xf32>
    %104 = tpu.matmul %96, %99, %cst_82 {dimension_numbers = #tpu.dot_dimension_numbers<[1], [0], [0], [1], [0, 0, 1, 1], [], []>} : vector<16x32xf32>, vector<32x96xf32>, vector<16x96xf32> -> vector<16x96xf32>
    %c2_83 = arith.constant 2 : index
    %c0_84 = arith.constant 0 : index
    %105 = vector.load %arg3[%c2_83, %c0_84] : memref<19x96xf32, #tpu.memory_space<vmem>>, vector<1x96xf32>
    %106 = vector.broadcast %105 : vector<1x96xf32> to vector<16x96xf32>
    %107 = arith.addf %104, %106 : vector<16x96xf32>
    %108 = vector.extract_strided_slice %107 {offsets = [0, 0], sizes = [16, 8], strides = [1, 1]} : vector<16x96xf32> to vector<16x8xf32>
    %109 = vector.shape_cast %108 : vector<16x8xf32> to vector<2x8x8xf32>
    %110 = vector.extract_strided_slice %107 {offsets = [0, 32], sizes = [16, 8], strides = [1, 1]} : vector<16x96xf32> to vector<16x8xf32>
    %111 = vector.shape_cast %110 : vector<16x8xf32> to vector<2x8x8xf32>
    %112 = vector.extract_strided_slice %107 {offsets = [0, 64], sizes = [16, 8], strides = [1, 1]} : vector<16x96xf32> to vector<16x8xf32>
    %113 = vector.shape_cast %112 : vector<16x8xf32> to vector<2x8x8xf32>
    "tpu.trace_start"() <{level = 10 : i32, message = "bqd,bkd->bqk"}> : () -> ()
    %cst_85 = arith.constant dense<0.000000e+00> : vector<2x8x8xf32>
    %114 = tpu.matmul %109, %111, %cst_85 {dimension_numbers = #tpu.dot_dimension_numbers<[2], [2], [1], [1], [0, 0, 0, 1, 1, 1], [0], [0]>} : vector<2x8x8xf32>, vector<2x8x8xf32>, vector<2x8x8xf32> -> vector<2x8x8xf32>
    "tpu.trace_stop"() : () -> ()
    %cst_86 = arith.constant dense<0xFF800000> : vector<2x8xf32>
    %115 = vector.multi_reduction <maximumf>, %114, %cst_86 [2] : vector<2x8x8xf32> to vector<2x8xf32>
    %116 = vector.shape_cast %115 : vector<2x8xf32> to vector<2x8x1xf32>
    %117 = vector.broadcast %116 : vector<2x8x1xf32> to vector<2x8x8xf32>
    %118 = arith.subf %114, %117 : vector<2x8x8xf32>
    %119 = math.exp %118 : vector<2x8x8xf32>
    %cst_87 = arith.constant dense<0.000000e+00> : vector<2x8xf32>
    %120 = vector.multi_reduction <add>, %119, %cst_87 [2] : vector<2x8x8xf32> to vector<2x8xf32>
    %121 = vector.shape_cast %120 : vector<2x8xf32> to vector<2x8x1xf32>
    %122 = tpu.reciprocal %121 {approx = true} : vector<2x8x1xf32> -> vector<2x8x1xf32>
    %123 = vector.broadcast %122 : vector<2x8x1xf32> to vector<2x8x8xf32>
    %124 = arith.mulf %119, %123 : vector<2x8x8xf32>
    "tpu.trace_start"() <{level = 10 : i32, message = "bqk,bkd->bqd"}> : () -> ()
    %cst_88 = arith.constant dense<0.000000e+00> : vector<2x8x8xf32>
    %125 = tpu.matmul %124, %113, %cst_88 {dimension_numbers = #tpu.dot_dimension_numbers<[2], [1], [1], [2], [0, 0, 0, 1, 1, 2], [0], [0]>} : vector<2x8x8xf32>, vector<2x8x8xf32>, vector<2x8x8xf32> -> vector<2x8x8xf32>
    "tpu.trace_stop"() : () -> ()
    %126 = vector.shape_cast %125 : vector<2x8x8xf32> to vector<16x8xf32>
    %c0_89 = arith.constant 0 : index
    %c0_90 = arith.constant 0 : index
    %127 = vector.load %arg8[%c0_89, %c0_90] : memref<16x32xf32, #tpu.memory_space<vmem>>, vector<16x8xf32>
    tpu.vector_store %arg8[%c0_89, %c0_90], %126 {strides = array<i32>} : memref<16x32xf32, #tpu.memory_space<vmem>>, vector<16x8xf32>,
    %128 = vector.extract_strided_slice %107 {offsets = [0, 8], sizes = [16, 8], strides = [1, 1]} : vector<16x96xf32> to vector<16x8xf32>
    %129 = vector.shape_cast %128 : vector<16x8xf32> to vector<2x8x8xf32>
    %130 = vector.extract_strided_slice %107 {offsets = [0, 40], sizes = [16, 8], strides = [1, 1]} : vector<16x96xf32> to vector<16x8xf32>
    %131 = vector.shape_cast %130 : vector<16x8xf32> to vector<2x8x8xf32>
    %132 = vector.extract_strided_slice %107 {offsets = [0, 72], sizes = [16, 8], strides = [1, 1]} : vector<16x96xf32> to vector<16x8xf32>
    %133 = vector.shape_cast %132 : vector<16x8xf32> to vector<2x8x8xf32>
    "tpu.trace_start"() <{level = 10 : i32, message = "bqd,bkd->bqk"}> : () -> ()
    %cst_91 = arith.constant dense<0.000000e+00> : vector<2x8x8xf32>
    %134 = tpu.matmul %129, %131, %cst_91 {dimension_numbers = #tpu.dot_dimension_numbers<[2], [2], [1], [1], [0, 0, 0, 1, 1, 1], [0], [0]>} : vector<2x8x8xf32>, vector<2x8x8xf32>, vector<2x8x8xf32> -> vector<2x8x8xf32>
    "tpu.trace_stop"() : () -> ()
    %cst_92 = arith.constant dense<0xFF800000> : vector<2x8xf32>
    %135 = vector.multi_reduction <maximumf>, %134, %cst_92 [2] : vector<2x8x8xf32> to vector<2x8xf32>
    %136 = vector.shape_cast %135 : vector<2x8xf32> to vector<2x8x1xf32>
    %137 = vector.broadcast %136 : vector<2x8x1xf32> to vector<2x8x8xf32>
    %138 = arith.subf %134, %137 : vector<2x8x8xf32>
    %139 = math.exp %138 : vector<2x8x8xf32>
    %cst_93 = arith.constant dense<0.000000e+00> : vector<2x8xf32>
    %140 = vector.multi_reduction <add>, %139, %cst_93 [2] : vector<2x8x8xf32> to vector<2x8xf32>
    %141 = vector.shape_cast %140 : vector<2x8xf32> to vector<2x8x1xf32>
    %142 = tpu.reciprocal %141 {approx = true} : vector<2x8x1xf32> -> vector<2x8x1xf32>
    %143 = vector.broadcast %142 : vector<2x8x1xf32> to vector<2x8x8xf32>
    %144 = arith.mulf %139, %143 : vector<2x8x8xf32>
    "tpu.trace_start"() <{level = 10 : i32, message = "bqk,bkd->bqd"}> : () -> ()
    %cst_94 = arith.constant dense<0.000000e+00> : vector<2x8x8xf32>
    %145 = tpu.matmul %144, %133, %cst_94 {dimension_numbers = #tpu.dot_dimension_numbers<[2], [1], [1], [2], [0, 0, 0, 1, 1, 2], [0], [0]>} : vector<2x8x8xf32>, vector<2x8x8xf32>, vector<2x8x8xf32> -> vector<2x8x8xf32>
    "tpu.trace_stop"() : () -> ()
    %146 = vector.shape_cast %145 : vector<2x8x8xf32> to vector<16x8xf32>
    %c0_95 = arith.constant 0 : index
    %c8_96 = arith.constant 8 : index
    %147 = vector.load %arg8[%c0_95, %c8_96] : memref<16x32xf32, #tpu.memory_space<vmem>>, vector<16x8xf32>
    tpu.vector_store %arg8[%c0_95, %c8_96], %146 {strides = array<i32>} : memref<16x32xf32, #tpu.memory_space<vmem>>, vector<16x8xf32>,
    %148 = vector.extract_strided_slice %107 {offsets = [0, 16], sizes = [16, 8], strides = [1, 1]} : vector<16x96xf32> to vector<16x8xf32>
    %149 = vector.shape_cast %148 : vector<16x8xf32> to vector<2x8x8xf32>
    %150 = vector.extract_strided_slice %107 {offsets = [0, 48], sizes = [16, 8], strides = [1, 1]} : vector<16x96xf32> to vector<16x8xf32>
    %151 = vector.shape_cast %150 : vector<16x8xf32> to vector<2x8x8xf32>
    %152 = vector.extract_strided_slice %107 {offsets = [0, 80], sizes = [16, 8], strides = [1, 1]} : vector<16x96xf32> to vector<16x8xf32>
    %153 = vector.shape_cast %152 : vector<16x8xf32> to vector<2x8x8xf32>
    "tpu.trace_start"() <{level = 10 : i32, message = "bqd,bkd->bqk"}> : () -> ()
    %cst_97 = arith.constant dense<0.000000e+00> : vector<2x8x8xf32>
    %154 = tpu.matmul %149, %151, %cst_97 {dimension_numbers = #tpu.dot_dimension_numbers<[2], [2], [1], [1], [0, 0, 0, 1, 1, 1], [0], [0]>} : vector<2x8x8xf32>, vector<2x8x8xf32>, vector<2x8x8xf32> -> vector<2x8x8xf32>
    "tpu.trace_stop"() : () -> ()
    %cst_98 = arith.constant dense<0xFF800000> : vector<2x8xf32>
    %155 = vector.multi_reduction <maximumf>, %154, %cst_98 [2] : vector<2x8x8xf32> to vector<2x8xf32>
    %156 = vector.shape_cast %155 : vector<2x8xf32> to vector<2x8x1xf32>
    %157 = vector.broadcast %156 : vector<2x8x1xf32> to vector<2x8x8xf32>
    %158 = arith.subf %154, %157 : vector<2x8x8xf32>
    %159 = math.exp %158 : vector<2x8x8xf32>
    %cst_99 = arith.constant dense<0.000000e+00> : vector<2x8xf32>
    %160 = vector.multi_reduction <add>, %159, %cst_99 [2] : vector<2x8x8xf32> to vector<2x8xf32>
    %161 = vector.shape_cast %160 : vector<2x8xf32> to vector<2x8x1xf32>
    %162 = tpu.reciprocal %161 {approx = true} : vector<2x8x1xf32> -> vector<2x8x1xf32>
    %163 = vector.broadcast %162 : vector<2x8x1xf32> to vector<2x8x8xf32>
    %164 = arith.mulf %159, %163 : vector<2x8x8xf32>
    "tpu.trace_start"() <{level = 10 : i32, message = "bqk,bkd->bqd"}> : () -> ()
    %cst_100 = arith.constant dense<0.000000e+00> : vector<2x8x8xf32>
    %165 = tpu.matmul %164, %153, %cst_100 {dimension_numbers = #tpu.dot_dimension_numbers<[2], [1], [1], [2], [0, 0, 0, 1, 1, 2], [0], [0]>} : vector<2x8x8xf32>, vector<2x8x8xf32>, vector<2x8x8xf32> -> vector<2x8x8xf32>
    "tpu.trace_stop"() : () -> ()
    %166 = vector.shape_cast %165 : vector<2x8x8xf32> to vector<16x8xf32>
    %c0_101 = arith.constant 0 : index
    %c16 = arith.constant 16 : index
    %167 = vector.load %arg8[%c0_101, %c16] : memref<16x32xf32, #tpu.memory_space<vmem>>, vector<16x8xf32>
    tpu.vector_store %arg8[%c0_101, %c16], %166 {strides = array<i32>} : memref<16x32xf32, #tpu.memory_space<vmem>>, vector<16x8xf32>,
    %168 = vector.extract_strided_slice %107 {offsets = [0, 24], sizes = [16, 8], strides = [1, 1]} : vector<16x96xf32> to vector<16x8xf32>
    %169 = vector.shape_cast %168 : vector<16x8xf32> to vector<2x8x8xf32>
    %170 = vector.extract_strided_slice %107 {offsets = [0, 56], sizes = [16, 8], strides = [1, 1]} : vector<16x96xf32> to vector<16x8xf32>
    %171 = vector.shape_cast %170 : vector<16x8xf32> to vector<2x8x8xf32>
    %172 = vector.extract_strided_slice %107 {offsets = [0, 88], sizes = [16, 8], strides = [1, 1]} : vector<16x96xf32> to vector<16x8xf32>
    %173 = vector.shape_cast %172 : vector<16x8xf32> to vector<2x8x8xf32>
    "tpu.trace_start"() <{level = 10 : i32, message = "bqd,bkd->bqk"}> : () -> ()
    %cst_102 = arith.constant dense<0.000000e+00> : vector<2x8x8xf32>
    %174 = tpu.matmul %169, %171, %cst_102 {dimension_numbers = #tpu.dot_dimension_numbers<[2], [2], [1], [1], [0, 0, 0, 1, 1, 1], [0], [0]>} : vector<2x8x8xf32>, vector<2x8x8xf32>, vector<2x8x8xf32> -> vector<2x8x8xf32>
    "tpu.trace_stop"() : () -> ()
    %cst_103 = arith.constant dense<0xFF800000> : vector<2x8xf32>
    %175 = vector.multi_reduction <maximumf>, %174, %cst_103 [2] : vector<2x8x8xf32> to vector<2x8xf32>
    %176 = vector.shape_cast %175 : vector<2x8xf32> to vector<2x8x1xf32>
    %177 = vector.broadcast %176 : vector<2x8x1xf32> to vector<2x8x8xf32>
    %178 = arith.subf %174, %177 : vector<2x8x8xf32>
    %179 = math.exp %178 : vector<2x8x8xf32>
    %cst_104 = arith.constant dense<0.000000e+00> : vector<2x8xf32>
    %180 = vector.multi_reduction <add>, %179, %cst_104 [2] : vector<2x8x8xf32> to vector<2x8xf32>
    %181 = vector.shape_cast %180 : vector<2x8xf32> to vector<2x8x1xf32>
    %182 = tpu.reciprocal %181 {approx = true} : vector<2x8x1xf32> -> vector<2x8x1xf32>
    %183 = vector.broadcast %182 : vector<2x8x1xf32> to vector<2x8x8xf32>
    %184 = arith.mulf %179, %183 : vector<2x8x8xf32>
    "tpu.trace_start"() <{level = 10 : i32, message = "bqk,bkd->bqd"}> : () -> ()
    %cst_105 = arith.constant dense<0.000000e+00> : vector<2x8x8xf32>
    %185 = tpu.matmul %184, %173, %cst_105 {dimension_numbers = #tpu.dot_dimension_numbers<[2], [1], [1], [2], [0, 0, 0, 1, 1, 2], [0], [0]>} : vector<2x8x8xf32>, vector<2x8x8xf32>, vector<2x8x8xf32> -> vector<2x8x8xf32>
    "tpu.trace_stop"() : () -> ()
    %186 = vector.shape_cast %185 : vector<2x8x8xf32> to vector<16x8xf32>
    %c0_106 = arith.constant 0 : index
    %c24 = arith.constant 24 : index
    %187 = vector.load %arg8[%c0_106, %c24] : memref<16x32xf32, #tpu.memory_space<vmem>>, vector<16x8xf32>
    tpu.vector_store %arg8[%c0_106, %c24], %186 {strides = array<i32>} : memref<16x32xf32, #tpu.memory_space<vmem>>, vector<16x8xf32>,
    %c0_107 = arith.constant 0 : index
    %c0_108 = arith.constant 0 : index
    %188 = vector.load %arg8[%c0_107, %c0_108] : memref<16x32xf32, #tpu.memory_space<vmem>>, vector<16x32xf32>
    %cst_109 = arith.constant dense<0.000000e+00> : vector<16x32xf32>
    %189 = tpu.matmul %188, %100, %cst_109 {dimension_numbers = #tpu.dot_dimension_numbers<[1], [0], [0], [1], [0, 0, 1, 1], [], []>} : vector<16x32xf32>, vector<32x32xf32>, vector<16x32xf32> -> vector<16x32xf32>
    %c3_110 = arith.constant 3 : index
    %c0_111 = arith.constant 0 : index
    %190 = vector.load %arg3[%c3_110, %c0_111] : memref<19x96xf32, #tpu.memory_space<vmem>>, vector<1x32xf32>
    %191 = vector.broadcast %190 : vector<1x32xf32> to vector<16x32xf32>
    %192 = arith.addf %189, %191 : vector<16x32xf32>
    %193 = arith.addf %192, %96 : vector<16x32xf32>
    %c4_112 = arith.constant 4 : index
    %c0_113 = arith.constant 0 : index
    %194 = vector.load %arg3[%c4_112, %c0_113] : memref<19x96xf32, #tpu.memory_space<vmem>>, vector<1x32xf32>
    %c5_114 = arith.constant 5 : index
    %c0_115 = arith.constant 0 : index
    %195 = vector.load %arg3[%c5_114, %c0_115] : memref<19x96xf32, #tpu.memory_space<vmem>>, vector<1x32xf32>
    %cst_116 = arith.constant dense<0.000000e+00> : vector<16xf32>
    %196 = vector.multi_reduction <add>, %193, %cst_116 [1] : vector<16x32xf32> to vector<16xf32>
    %197 = vector.shape_cast %196 : vector<16xf32> to vector<16x1xf32>
    %cst_117 = arith.constant 3.200000e+01 : f32
    %198 = vector.broadcast %cst_117 : f32 to vector<16x1xf32>
    %199 = arith.divf %197, %198 : vector<16x1xf32>
    %200 = vector.broadcast %199 : vector<16x1xf32> to vector<16x32xf32>
    %201 = arith.subf %193, %200 : vector<16x32xf32>
    %202 = vector.broadcast %199 : vector<16x1xf32> to vector<16x32xf32>
    %203 = arith.subf %193, %202 : vector<16x32xf32>
    %204 = arith.mulf %201, %203 : vector<16x32xf32>
    %cst_118 = arith.constant dense<0.000000e+00> : vector<16xf32>
    %205 = vector.multi_reduction <add>, %204, %cst_118 [1] : vector<16x32xf32> to vector<16xf32>
    %206 = vector.shape_cast %205 : vector<16xf32> to vector<16x1xf32>
    %cst_119 = arith.constant 3.200000e+01 : f32
    %207 = vector.broadcast %cst_119 : f32 to vector<16x1xf32>
    %208 = arith.divf %206, %207 : vector<16x1xf32>
    %209 = vector.broadcast %199 : vector<16x1xf32> to vector<16x32xf32>
    %210 = arith.subf %193, %209 : vector<16x32xf32>
    %cst_120 = arith.constant 9.99999996E-13 : f32
    %211 = vector.broadcast %cst_120 : f32 to vector<16x1xf32>
    %212 = arith.addf %208, %211 : vector<16x1xf32>
    %213 = math.rsqrt %212 : vector<16x1xf32>
    %214 = vector.broadcast %213 : vector<16x1xf32> to vector<16x32xf32>
    %215 = arith.mulf %210, %214 : vector<16x32xf32>
    %216 = vector.broadcast %194 : vector<1x32xf32> to vector<16x32xf32>
    %217 = arith.mulf %215, %216 : vector<16x32xf32>
    %218 = vector.broadcast %195 : vector<1x32xf32> to vector<16x32xf32>
    %219 = arith.addf %217, %218 : vector<16x32xf32>
    %cst_121 = arith.constant dense<0.000000e+00> : vector<16x64xf32>
    %220 = tpu.matmul %219, %101, %cst_121 {dimension_numbers = #tpu.dot_dimension_numbers<[1], [0], [0], [1], [0, 0, 1, 1], [], []>} : vector<16x32xf32>, vector<32x64xf32>, vector<16x64xf32> -> vector<16x64xf32>
    %c6_122 = arith.constant 6 : index
    %c0_123 = arith.constant 0 : index
    %221 = vector.load %arg3[%c6_122, %c0_123] : memref<19x96xf32, #tpu.memory_space<vmem>>, vector<1x64xf32>
    %222 = vector.broadcast %221 : vector<1x64xf32> to vector<16x64xf32>
    %223 = arith.addf %220, %222 : vector<16x64xf32>
    %cst_124 = arith.constant 5.000000e-01 : f32
    %224 = vector.broadcast %cst_124 : f32 to vector<16x64xf32>
    %225 = arith.mulf %224, %223 : vector<16x64xf32>
    %cst_125 = arith.constant 4.471500e-02 : f32
    %226 = vector.broadcast %cst_125 : f32 to vector<16x64xf32>
    %227 = arith.mulf %226, %223 : vector<16x64xf32>
    %228 = arith.mulf %227, %223 : vector<16x64xf32>
    %229 = arith.mulf %228, %223 : vector<16x64xf32>
    %230 = arith.addf %223, %229 : vector<16x64xf32>
    %cst_126 = arith.constant 0.797884583 : f32
    %231 = vector.broadcast %cst_126 : f32 to vector<16x64xf32>
    %232 = arith.mulf %231, %230 : vector<16x64xf32>
    %233 = math.tanh %232 : vector<16x64xf32>
    %cst_127 = arith.constant 1.000000e+00 : f32
    %234 = vector.broadcast %cst_127 : f32 to vector<16x64xf32>
    %235 = arith.addf %234, %233 : vector<16x64xf32>
    %236 = arith.mulf %225, %235 : vector<16x64xf32>
    %cst_128 = arith.constant dense<0.000000e+00> : vector<16x32xf32>
    %237 = tpu.matmul %236, %103, %cst_128 {dimension_numbers = #tpu.dot_dimension_numbers<[1], [0], [0], [1], [0, 0, 1, 1], [], []>} : vector<16x64xf32>, vector<64x32xf32>, vector<16x32xf32> -> vector<16x32xf32>
    %c7_129 = arith.constant 7 : index
    %c0_130 = arith.constant 0 : index
    %238 = vector.load %arg3[%c7_129, %c0_130] : memref<19x96xf32, #tpu.memory_space<vmem>>, vector<1x32xf32>
    %239 = vector.broadcast %238 : vector<1x32xf32> to vector<16x32xf32>
    %240 = arith.addf %237, %239 : vector<16x32xf32>
    %241 = arith.addf %240, %219 : vector<16x32xf32>
    %c8_131 = arith.constant 8 : index
    %c0_132 = arith.constant 0 : index
    %242 = vector.load %arg3[%c8_131, %c0_132] : memref<19x96xf32, #tpu.memory_space<vmem>>, vector<1x32xf32>
    %c9_133 = arith.constant 9 : index
    %c0_134 = arith.constant 0 : index
    %243 = vector.load %arg3[%c9_133, %c0_134] : memref<19x96xf32, #tpu.memory_space<vmem>>, vector<1x32xf32>
    %cst_135 = arith.constant dense<0.000000e+00> : vector<16xf32>
    %244 = vector.multi_reduction <add>, %241, %cst_135 [1] : vector<16x32xf32> to vector<16xf32>
    %245 = vector.shape_cast %244 : vector<16xf32> to vector<16x1xf32>
    %cst_136 = arith.constant 3.200000e+01 : f32
    %246 = vector.broadcast %cst_136 : f32 to vector<16x1xf32>
    %247 = arith.divf %245, %246 : vector<16x1xf32>
    %248 = vector.broadcast %247 : vector<16x1xf32> to vector<16x32xf32>
    %249 = arith.subf %241, %248 : vector<16x32xf32>
    %250 = vector.broadcast %247 : vector<16x1xf32> to vector<16x32xf32>
    %251 = arith.subf %241, %250 : vector<16x32xf32>
    %252 = arith.mulf %249, %251 : vector<16x32xf32>
    %cst_137 = arith.constant dense<0.000000e+00> : vector<16xf32>
    %253 = vector.multi_reduction <add>, %252, %cst_137 [1] : vector<16x32xf32> to vector<16xf32>
    %254 = vector.shape_cast %253 : vector<16xf32> to vector<16x1xf32>
    %cst_138 = arith.constant 3.200000e+01 : f32
    %255 = vector.broadcast %cst_138 : f32 to vector<16x1xf32>
    %256 = arith.divf %254, %255 : vector<16x1xf32>
    %257 = vector.broadcast %247 : vector<16x1xf32> to vector<16x32xf32>
    %258 = arith.subf %241, %257 : vector<16x32xf32>
    %cst_139 = arith.constant 9.99999996E-13 : f32
    %259 = vector.broadcast %cst_139 : f32 to vector<16x1xf32>
    %260 = arith.addf %256, %259 : vector<16x1xf32>
    %261 = math.rsqrt %260 : vector<16x1xf32>
    %262 = vector.broadcast %261 : vector<16x1xf32> to vector<16x32xf32>
    %263 = arith.mulf %258, %262 : vector<16x32xf32>
    %264 = vector.broadcast %242 : vector<1x32xf32> to vector<16x32xf32>
    %265 = arith.mulf %263, %264 : vector<16x32xf32>
    %266 = vector.broadcast %243 : vector<1x32xf32> to vector<16x32xf32>
    %267 = arith.addf %265, %266 : vector<16x32xf32>
    %c1_140 = arith.constant 1 : index
    %c0_141 = arith.constant 0 : index
    %c0_142 = arith.constant 0 : index
    %268 = vector.load %arg4[%c1_140, %c0_141, %c0_142] : memref<2x32x224xf32, #tpu.memory_space<vmem>>, vector<1x32x224xf32>
    %269 = vector.shape_cast %268 : vector<1x32x224xf32> to vector<32x224xf32>
    %270 = vector.extract_strided_slice %269 {offsets = [0, 0], sizes = [32, 96], strides = [1, 1]} : vector<32x224xf32> to vector<32x96xf32>
    %271 = vector.extract_strided_slice %269 {offsets = [0, 96], sizes = [32, 32], strides = [1, 1]} : vector<32x224xf32> to vector<32x32xf32>
    %272 = vector.extract_strided_slice %269 {offsets = [0, 128], sizes = [32, 64], strides = [1, 1]} : vector<32x224xf32> to vector<32x64xf32>
    %c1_143 = arith.constant 1 : index
    %c0_144 = arith.constant 0 : index
    %c0_145 = arith.constant 0 : index
    %273 = vector.load %arg5[%c1_143, %c0_144, %c0_145] : memref<2x64x32xf32, #tpu.memory_space<vmem>>, vector<1x64x32xf32>
    %274 = vector.shape_cast %273 : vector<1x64x32xf32> to vector<64x32xf32>
    %cst_146 = arith.constant dense<0.000000e+00> : vector<16x96xf32>
    %275 = tpu.matmul %267, %270, %cst_146 {dimension_numbers = #tpu.dot_dimension_numbers<[1], [0], [0], [1], [0, 0, 1, 1], [], []>} : vector<16x32xf32>, vector<32x96xf32>, vector<16x96xf32> -> vector<16x96xf32>
    %c10_147 = arith.constant 10 : index
    %c0_148 = arith.constant 0 : index
    %276 = vector.load %arg3[%c10_147, %c0_148] : memref<19x96xf32, #tpu.memory_space<vmem>>, vector<1x96xf32>
    %277 = vector.broadcast %276 : vector<1x96xf32> to vector<16x96xf32>
    %278 = arith.addf %275, %277 : vector<16x96xf32>
    %279 = vector.extract_strided_slice %278 {offsets = [0, 0], sizes = [16, 8], strides = [1, 1]} : vector<16x96xf32> to vector<16x8xf32>
    %280 = vector.shape_cast %279 : vector<16x8xf32> to vector<2x8x8xf32>
    %281 = vector.extract_strided_slice %278 {offsets = [0, 32], sizes = [16, 8], strides = [1, 1]} : vector<16x96xf32> to vector<16x8xf32>
    %282 = vector.shape_cast %281 : vector<16x8xf32> to vector<2x8x8xf32>
    %283 = vector.extract_strided_slice %278 {offsets = [0, 64], sizes = [16, 8], strides = [1, 1]} : vector<16x96xf32> to vector<16x8xf32>
    %284 = vector.shape_cast %283 : vector<16x8xf32> to vector<2x8x8xf32>
    "tpu.trace_start"() <{level = 10 : i32, message = "bqd,bkd->bqk"}> : () -> ()
    %cst_149 = arith.constant dense<0.000000e+00> : vector<2x8x8xf32>
    %285 = tpu.matmul %280, %282, %cst_149 {dimension_numbers = #tpu.dot_dimension_numbers<[2], [2], [1], [1], [0, 0, 0, 1, 1, 1], [0], [0]>} : vector<2x8x8xf32>, vector<2x8x8xf32>, vector<2x8x8xf32> -> vector<2x8x8xf32>
    "tpu.trace_stop"() : () -> ()
    %cst_150 = arith.constant dense<0xFF800000> : vector<2x8xf32>
    %286 = vector.multi_reduction <maximumf>, %285, %cst_150 [2] : vector<2x8x8xf32> to vector<2x8xf32>
    %287 = vector.shape_cast %286 : vector<2x8xf32> to vector<2x8x1xf32>
    %288 = vector.broadcast %287 : vector<2x8x1xf32> to vector<2x8x8xf32>
    %289 = arith.subf %285, %288 : vector<2x8x8xf32>
    %290 = math.exp %289 : vector<2x8x8xf32>
    %cst_151 = arith.constant dense<0.000000e+00> : vector<2x8xf32>
    %291 = vector.multi_reduction <add>, %290, %cst_151 [2] : vector<2x8x8xf32> to vector<2x8xf32>
    %292 = vector.shape_cast %291 : vector<2x8xf32> to vector<2x8x1xf32>
    %293 = tpu.reciprocal %292 {approx = true} : vector<2x8x1xf32> -> vector<2x8x1xf32>
    %294 = vector.broadcast %293 : vector<2x8x1xf32> to vector<2x8x8xf32>
    %295 = arith.mulf %290, %294 : vector<2x8x8xf32>
    "tpu.trace_start"() <{level = 10 : i32, message = "bqk,bkd->bqd"}> : () -> ()
    %cst_152 = arith.constant dense<0.000000e+00> : vector<2x8x8xf32>
    %296 = tpu.matmul %295, %284, %cst_152 {dimension_numbers = #tpu.dot_dimension_numbers<[2], [1], [1], [2], [0, 0, 0, 1, 1, 2], [0], [0]>} : vector<2x8x8xf32>, vector<2x8x8xf32>, vector<2x8x8xf32> -> vector<2x8x8xf32>
    "tpu.trace_stop"() : () -> ()
    %297 = vector.shape_cast %296 : vector<2x8x8xf32> to vector<16x8xf32>
    %c0_153 = arith.constant 0 : index
    %c0_154 = arith.constant 0 : index
    %298 = vector.load %arg8[%c0_153, %c0_154] : memref<16x32xf32, #tpu.memory_space<vmem>>, vector<16x8xf32>
    tpu.vector_store %arg8[%c0_153, %c0_154], %297 {strides = array<i32>} : memref<16x32xf32, #tpu.memory_space<vmem>>, vector<16x8xf32>,
    %299 = vector.extract_strided_slice %278 {offsets = [0, 8], sizes = [16, 8], strides = [1, 1]} : vector<16x96xf32> to vector<16x8xf32>
    %300 = vector.shape_cast %299 : vector<16x8xf32> to vector<2x8x8xf32>
    %301 = vector.extract_strided_slice %278 {offsets = [0, 40], sizes = [16, 8], strides = [1, 1]} : vector<16x96xf32> to vector<16x8xf32>
    %302 = vector.shape_cast %301 : vector<16x8xf32> to vector<2x8x8xf32>
    %303 = vector.extract_strided_slice %278 {offsets = [0, 72], sizes = [16, 8], strides = [1, 1]} : vector<16x96xf32> to vector<16x8xf32>
    %304 = vector.shape_cast %303 : vector<16x8xf32> to vector<2x8x8xf32>
    "tpu.trace_start"() <{level = 10 : i32, message = "bqd,bkd->bqk"}> : () -> ()
    %cst_155 = arith.constant dense<0.000000e+00> : vector<2x8x8xf32>
    %305 = tpu.matmul %300, %302, %cst_155 {dimension_numbers = #tpu.dot_dimension_numbers<[2], [2], [1], [1], [0, 0, 0, 1, 1, 1], [0], [0]>} : vector<2x8x8xf32>, vector<2x8x8xf32>, vector<2x8x8xf32> -> vector<2x8x8xf32>
    "tpu.trace_stop"() : () -> ()
    %cst_156 = arith.constant dense<0xFF800000> : vector<2x8xf32>
    %306 = vector.multi_reduction <maximumf>, %305, %cst_156 [2] : vector<2x8x8xf32> to vector<2x8xf32>
    %307 = vector.shape_cast %306 : vector<2x8xf32> to vector<2x8x1xf32>
    %308 = vector.broadcast %307 : vector<2x8x1xf32> to vector<2x8x8xf32>
    %309 = arith.subf %305, %308 : vector<2x8x8xf32>
    %310 = math.exp %309 : vector<2x8x8xf32>
    %cst_157 = arith.constant dense<0.000000e+00> : vector<2x8xf32>
    %311 = vector.multi_reduction <add>, %310, %cst_157 [2] : vector<2x8x8xf32> to vector<2x8xf32>
    %312 = vector.shape_cast %311 : vector<2x8xf32> to vector<2x8x1xf32>
    %313 = tpu.reciprocal %312 {approx = true} : vector<2x8x1xf32> -> vector<2x8x1xf32>
    %314 = vector.broadcast %313 : vector<2x8x1xf32> to vector<2x8x8xf32>
    %315 = arith.mulf %310, %314 : vector<2x8x8xf32>
    "tpu.trace_start"() <{level = 10 : i32, message = "bqk,bkd->bqd"}> : () -> ()
    %cst_158 = arith.constant dense<0.000000e+00> : vector<2x8x8xf32>
    %316 = tpu.matmul %315, %304, %cst_158 {dimension_numbers = #tpu.dot_dimension_numbers<[2], [1], [1], [2], [0, 0, 0, 1, 1, 2], [0], [0]>} : vector<2x8x8xf32>, vector<2x8x8xf32>, vector<2x8x8xf32> -> vector<2x8x8xf32>
    "tpu.trace_stop"() : () -> ()
    %317 = vector.shape_cast %316 : vector<2x8x8xf32> to vector<16x8xf32>
    %c0_159 = arith.constant 0 : index
    %c8_160 = arith.constant 8 : index
    %318 = vector.load %arg8[%c0_159, %c8_160] : memref<16x32xf32, #tpu.memory_space<vmem>>, vector<16x8xf32>
    tpu.vector_store %arg8[%c0_159, %c8_160], %317 {strides = array<i32>} : memref<16x32xf32, #tpu.memory_space<vmem>>, vector<16x8xf32>,
    %319 = vector.extract_strided_slice %278 {offsets = [0, 16], sizes = [16, 8], strides = [1, 1]} : vector<16x96xf32> to vector<16x8xf32>
    %320 = vector.shape_cast %319 : vector<16x8xf32> to vector<2x8x8xf32>
    %321 = vector.extract_strided_slice %278 {offsets = [0, 48], sizes = [16, 8], strides = [1, 1]} : vector<16x96xf32> to vector<16x8xf32>
    %322 = vector.shape_cast %321 : vector<16x8xf32> to vector<2x8x8xf32>
    %323 = vector.extract_strided_slice %278 {offsets = [0, 80], sizes = [16, 8], strides = [1, 1]} : vector<16x96xf32> to vector<16x8xf32>
    %324 = vector.shape_cast %323 : vector<16x8xf32> to vector<2x8x8xf32>
    "tpu.trace_start"() <{level = 10 : i32, message = "bqd,bkd->bqk"}> : () -> ()
    %cst_161 = arith.constant dense<0.000000e+00> : vector<2x8x8xf32>
    %325 = tpu.matmul %320, %322, %cst_161 {dimension_numbers = #tpu.dot_dimension_numbers<[2], [2], [1], [1], [0, 0, 0, 1, 1, 1], [0], [0]>} : vector<2x8x8xf32>, vector<2x8x8xf32>, vector<2x8x8xf32> -> vector<2x8x8xf32>
    "tpu.trace_stop"() : () -> ()
    %cst_162 = arith.constant dense<0xFF800000> : vector<2x8xf32>
    %326 = vector.multi_reduction <maximumf>, %325, %cst_162 [2] : vector<2x8x8xf32> to vector<2x8xf32>
    %327 = vector.shape_cast %326 : vector<2x8xf32> to vector<2x8x1xf32>
    %328 = vector.broadcast %327 : vector<2x8x1xf32> to vector<2x8x8xf32>
    %329 = arith.subf %325, %328 : vector<2x8x8xf32>
    %330 = math.exp %329 : vector<2x8x8xf32>
    %cst_163 = arith.constant dense<0.000000e+00> : vector<2x8xf32>
    %331 = vector.multi_reduction <add>, %330, %cst_163 [2] : vector<2x8x8xf32> to vector<2x8xf32>
    %332 = vector.shape_cast %331 : vector<2x8xf32> to vector<2x8x1xf32>
    %333 = tpu.reciprocal %332 {approx = true} : vector<2x8x1xf32> -> vector<2x8x1xf32>
    %334 = vector.broadcast %333 : vector<2x8x1xf32> to vector<2x8x8xf32>
    %335 = arith.mulf %330, %334 : vector<2x8x8xf32>
    "tpu.trace_start"() <{level = 10 : i32, message = "bqk,bkd->bqd"}> : () -> ()
    %cst_164 = arith.constant dense<0.000000e+00> : vector<2x8x8xf32>
    %336 = tpu.matmul %335, %324, %cst_164 {dimension_numbers = #tpu.dot_dimension_numbers<[2], [1], [1], [2], [0, 0, 0, 1, 1, 2], [0], [0]>} : vector<2x8x8xf32>, vector<2x8x8xf32>, vector<2x8x8xf32> -> vector<2x8x8xf32>
    "tpu.trace_stop"() : () -> ()
    %337 = vector.shape_cast %336 : vector<2x8x8xf32> to vector<16x8xf32>
    %c0_165 = arith.constant 0 : index
    %c16_166 = arith.constant 16 : index
    %338 = vector.load %arg8[%c0_165, %c16_166] : memref<16x32xf32, #tpu.memory_space<vmem>>, vector<16x8xf32>
    tpu.vector_store %arg8[%c0_165, %c16_166], %337 {strides = array<i32>} : memref<16x32xf32, #tpu.memory_space<vmem>>, vector<16x8xf32>,
    %339 = vector.extract_strided_slice %278 {offsets = [0, 24], sizes = [16, 8], strides = [1, 1]} : vector<16x96xf32> to vector<16x8xf32>
    %340 = vector.shape_cast %339 : vector<16x8xf32> to vector<2x8x8xf32>
    %341 = vector.extract_strided_slice %278 {offsets = [0, 56], sizes = [16, 8], strides = [1, 1]} : vector<16x96xf32> to vector<16x8xf32>
    %342 = vector.shape_cast %341 : vector<16x8xf32> to vector<2x8x8xf32>
    %343 = vector.extract_strided_slice %278 {offsets = [0, 88], sizes = [16, 8], strides = [1, 1]} : vector<16x96xf32> to vector<16x8xf32>
    %344 = vector.shape_cast %343 : vector<16x8xf32> to vector<2x8x8xf32>
    "tpu.trace_start"() <{level = 10 : i32, message = "bqd,bkd->bqk"}> : () -> ()
    %cst_167 = arith.constant dense<0.000000e+00> : vector<2x8x8xf32>
    %345 = tpu.matmul %340, %342, %cst_167 {dimension_numbers = #tpu.dot_dimension_numbers<[2], [2], [1], [1], [0, 0, 0, 1, 1, 1], [0], [0]>} : vector<2x8x8xf32>, vector<2x8x8xf32>, vector<2x8x8xf32> -> vector<2x8x8xf32>
    "tpu.trace_stop"() : () -> ()
    %cst_168 = arith.constant dense<0xFF800000> : vector<2x8xf32>
    %346 = vector.multi_reduction <maximumf>, %345, %cst_168 [2] : vector<2x8x8xf32> to vector<2x8xf32>
    %347 = vector.shape_cast %346 : vector<2x8xf32> to vector<2x8x1xf32>
    %348 = vector.broadcast %347 : vector<2x8x1xf32> to vector<2x8x8xf32>
    %349 = arith.subf %345, %348 : vector<2x8x8xf32>
    %350 = math.exp %349 : vector<2x8x8xf32>
    %cst_169 = arith.constant dense<0.000000e+00> : vector<2x8xf32>
    %351 = vector.multi_reduction <add>, %350, %cst_169 [2] : vector<2x8x8xf32> to vector<2x8xf32>
    %352 = vector.shape_cast %351 : vector<2x8xf32> to vector<2x8x1xf32>
    %353 = tpu.reciprocal %352 {approx = true} : vector<2x8x1xf32> -> vector<2x8x1xf32>
    %354 = vector.broadcast %353 : vector<2x8x1xf32> to vector<2x8x8xf32>
    %355 = arith.mulf %350, %354 : vector<2x8x8xf32>
    "tpu.trace_start"() <{level = 10 : i32, message = "bqk,bkd->bqd"}> : () -> ()
    %cst_170 = arith.constant dense<0.000000e+00> : vector<2x8x8xf32>
    %356 = tpu.matmul %355, %344, %cst_170 {dimension_numbers = #tpu.dot_dimension_numbers<[2], [1], [1], [2], [0, 0, 0, 1, 1, 2], [0], [0]>} : vector<2x8x8xf32>, vector<2x8x8xf32>, vector<2x8x8xf32> -> vector<2x8x8xf32>
    "tpu.trace_stop"() : () -> ()
    %357 = vector.shape_cast %356 : vector<2x8x8xf32> to vector<16x8xf32>
    %c0_171 = arith.constant 0 : index
    %c24_172 = arith.constant 24 : index
    %358 = vector.load %arg8[%c0_171, %c24_172] : memref<16x32xf32, #tpu.memory_space<vmem>>, vector<16x8xf32>
    tpu.vector_store %arg8[%c0_171, %c24_172], %357 {strides = array<i32>} : memref<16x32xf32, #tpu.memory_space<vmem>>, vector<16x8xf32>,
    %c0_173 = arith.constant 0 : index
    %c0_174 = arith.constant 0 : index
    %359 = vector.load %arg8[%c0_173, %c0_174] : memref<16x32xf32, #tpu.memory_space<vmem>>, vector<16x32xf32>
    %cst_175 = arith.constant dense<0.000000e+00> : vector<16x32xf32>
    %360 = tpu.matmul %359, %271, %cst_175 {dimension_numbers = #tpu.dot_dimension_numbers<[1], [0], [0], [1], [0, 0, 1, 1], [], []>} : vector<16x32xf32>, vector<32x32xf32>, vector<16x32xf32> -> vector<16x32xf32>
    %c11_176 = arith.constant 11 : index
    %c0_177 = arith.constant 0 : index
    %361 = vector.load %arg3[%c11_176, %c0_177] : memref<19x96xf32, #tpu.memory_space<vmem>>, vector<1x32xf32>
    %362 = vector.broadcast %361 : vector<1x32xf32> to vector<16x32xf32>
    %363 = arith.addf %360, %362 : vector<16x32xf32>
    %364 = arith.addf %363, %267 : vector<16x32xf32>
    %c12_178 = arith.constant 12 : index
    %c0_179 = arith.constant 0 : index
    %365 = vector.load %arg3[%c12_178, %c0_179] : memref<19x96xf32, #tpu.memory_space<vmem>>, vector<1x32xf32>
    %c13_180 = arith.constant 13 : index
    %c0_181 = arith.constant 0 : index
    %366 = vector.load %arg3[%c13_180, %c0_181] : memref<19x96xf32, #tpu.memory_space<vmem>>, vector<1x32xf32>
    %cst_182 = arith.constant dense<0.000000e+00> : vector<16xf32>
    %367 = vector.multi_reduction <add>, %364, %cst_182 [1] : vector<16x32xf32> to vector<16xf32>
    %368 = vector.shape_cast %367 : vector<16xf32> to vector<16x1xf32>
    %cst_183 = arith.constant 3.200000e+01 : f32
    %369 = vector.broadcast %cst_183 : f32 to vector<16x1xf32>
    %370 = arith.divf %368, %369 : vector<16x1xf32>
    %371 = vector.broadcast %370 : vector<16x1xf32> to vector<16x32xf32>
    %372 = arith.subf %364, %371 : vector<16x32xf32>
    %373 = vector.broadcast %370 : vector<16x1xf32> to vector<16x32xf32>
    %374 = arith.subf %364, %373 : vector<16x32xf32>
    %375 = arith.mulf %372, %374 : vector<16x32xf32>
    %cst_184 = arith.constant dense<0.000000e+00> : vector<16xf32>
    %376 = vector.multi_reduction <add>, %375, %cst_184 [1] : vector<16x32xf32> to vector<16xf32>
    %377 = vector.shape_cast %376 : vector<16xf32> to vector<16x1xf32>
    %cst_185 = arith.constant 3.200000e+01 : f32
    %378 = vector.broadcast %cst_185 : f32 to vector<16x1xf32>
    %379 = arith.divf %377, %378 : vector<16x1xf32>
    %380 = vector.broadcast %370 : vector<16x1xf32> to vector<16x32xf32>
    %381 = arith.subf %364, %380 : vector<16x32xf32>
    %cst_186 = arith.constant 9.99999996E-13 : f32
    %382 = vector.broadcast %cst_186 : f32 to vector<16x1xf32>
    %383 = arith.addf %379, %382 : vector<16x1xf32>
    %384 = math.rsqrt %383 : vector<16x1xf32>
    %385 = vector.broadcast %384 : vector<16x1xf32> to vector<16x32xf32>
    %386 = arith.mulf %381, %385 : vector<16x32xf32>
    %387 = vector.broadcast %365 : vector<1x32xf32> to vector<16x32xf32>
    %388 = arith.mulf %386, %387 : vector<16x32xf32>
    %389 = vector.broadcast %366 : vector<1x32xf32> to vector<16x32xf32>
    %390 = arith.addf %388, %389 : vector<16x32xf32>
    %cst_187 = arith.constant dense<0.000000e+00> : vector<16x64xf32>
    %391 = tpu.matmul %390, %272, %cst_187 {dimension_numbers = #tpu.dot_dimension_numbers<[1], [0], [0], [1], [0, 0, 1, 1], [], []>} : vector<16x32xf32>, vector<32x64xf32>, vector<16x64xf32> -> vector<16x64xf32>
    %c14_188 = arith.constant 14 : index
    %c0_189 = arith.constant 0 : index
    %392 = vector.load %arg3[%c14_188, %c0_189] : memref<19x96xf32, #tpu.memory_space<vmem>>, vector<1x64xf32>
    %393 = vector.broadcast %392 : vector<1x64xf32> to vector<16x64xf32>
    %394 = arith.addf %391, %393 : vector<16x64xf32>
    %cst_190 = arith.constant 5.000000e-01 : f32
    %395 = vector.broadcast %cst_190 : f32 to vector<16x64xf32>
    %396 = arith.mulf %395, %394 : vector<16x64xf32>
    %cst_191 = arith.constant 4.471500e-02 : f32
    %397 = vector.broadcast %cst_191 : f32 to vector<16x64xf32>
    %398 = arith.mulf %397, %394 : vector<16x64xf32>
    %399 = arith.mulf %398, %394 : vector<16x64xf32>
    %400 = arith.mulf %399, %394 : vector<16x64xf32>
    %401 = arith.addf %394, %400 : vector<16x64xf32>
    %cst_192 = arith.constant 0.797884583 : f32
    %402 = vector.broadcast %cst_192 : f32 to vector<16x64xf32>
    %403 = arith.mulf %402, %401 : vector<16x64xf32>
    %404 = math.tanh %403 : vector<16x64xf32>
    %cst_193 = arith.constant 1.000000e+00 : f32
    %405 = vector.broadcast %cst_193 : f32 to vector<16x64xf32>
    %406 = arith.addf %405, %404 : vector<16x64xf32>
    %407 = arith.mulf %396, %406 : vector<16x64xf32>
    %cst_194 = arith.constant dense<0.000000e+00> : vector<16x32xf32>
    %408 = tpu.matmul %407, %274, %cst_194 {dimension_numbers = #tpu.dot_dimension_numbers<[1], [0], [0], [1], [0, 0, 1, 1], [], []>} : vector<16x64xf32>, vector<64x32xf32>, vector<16x32xf32> -> vector<16x32xf32>
    %c15_195 = arith.constant 15 : index
    %c0_196 = arith.constant 0 : index
    %409 = vector.load %arg3[%c15_195, %c0_196] : memref<19x96xf32, #tpu.memory_space<vmem>>, vector<1x32xf32>
    %410 = vector.broadcast %409 : vector<1x32xf32> to vector<16x32xf32>
    %411 = arith.addf %408, %410 : vector<16x32xf32>
    %412 = arith.addf %411, %390 : vector<16x32xf32>
    %c16_197 = arith.constant 16 : index
    %c0_198 = arith.constant 0 : index
    %413 = vector.load %arg3[%c16_197, %c0_198] : memref<19x96xf32, #tpu.memory_space<vmem>>, vector<1x32xf32>
    %c17 = arith.constant 17 : index
    %c0_199 = arith.constant 0 : index
    %414 = vector.load %arg3[%c17, %c0_199] : memref<19x96xf32, #tpu.memory_space<vmem>>, vector<1x32xf32>
    %cst_200 = arith.constant dense<0.000000e+00> : vector<16xf32>
    %415 = vector.multi_reduction <add>, %412, %cst_200 [1] : vector<16x32xf32> to vector<16xf32>
    %416 = vector.shape_cast %415 : vector<16xf32> to vector<16x1xf32>
    %cst_201 = arith.constant 3.200000e+01 : f32
    %417 = vector.broadcast %cst_201 : f32 to vector<16x1xf32>
    %418 = arith.divf %416, %417 : vector<16x1xf32>
    %419 = vector.broadcast %418 : vector<16x1xf32> to vector<16x32xf32>
    %420 = arith.subf %412, %419 : vector<16x32xf32>
    %421 = vector.broadcast %418 : vector<16x1xf32> to vector<16x32xf32>
    %422 = arith.subf %412, %421 : vector<16x32xf32>
    %423 = arith.mulf %420, %422 : vector<16x32xf32>
    %cst_202 = arith.constant dense<0.000000e+00> : vector<16xf32>
    %424 = vector.multi_reduction <add>, %423, %cst_202 [1] : vector<16x32xf32> to vector<16xf32>
    %425 = vector.shape_cast %424 : vector<16xf32> to vector<16x1xf32>
    %cst_203 = arith.constant 3.200000e+01 : f32
    %426 = vector.broadcast %cst_203 : f32 to vector<16x1xf32>
    %427 = arith.divf %425, %426 : vector<16x1xf32>
    %428 = vector.broadcast %418 : vector<16x1xf32> to vector<16x32xf32>
    %429 = arith.subf %412, %428 : vector<16x32xf32>
    %cst_204 = arith.constant 9.99999996E-13 : f32
    %430 = vector.broadcast %cst_204 : f32 to vector<16x1xf32>
    %431 = arith.addf %427, %430 : vector<16x1xf32>
    %432 = math.rsqrt %431 : vector<16x1xf32>
    %433 = vector.broadcast %432 : vector<16x1xf32> to vector<16x32xf32>
    %434 = arith.mulf %429, %433 : vector<16x32xf32>
    %435 = vector.broadcast %413 : vector<1x32xf32> to vector<16x32xf32>
    %436 = arith.mulf %434, %435 : vector<16x32xf32>
    %437 = vector.broadcast %414 : vector<1x32xf32> to vector<16x32xf32>
    %438 = arith.addf %436, %437 : vector<16x32xf32>
    %439 = vector.extract_strided_slice %438 {offsets = [0, 0], sizes = [1, 32], strides = [1, 1]} : vector<16x32xf32> to vector<1x32xf32>
    %440 = vector.extract_strided_slice %438 {offsets = [8, 0], sizes = [1, 32], strides = [1, 1]} : vector<16x32xf32> to vector<1x32xf32>
    %441 = tpu.concatenate %439, %440 in 0 : vector<1x32xf32>, vector<1x32xf32> -> vector<2x32xf32>
    %c0_205 = arith.constant 0 : index
    %c0_206 = arith.constant 0 : index
    %c0_207 = arith.constant 0 : index
    %442 = vector.load %arg4[%c0_205, %c0_206, %c0_207] : memref<2x32x224xf32, #tpu.memory_space<vmem>>, vector<1x32x224xf32>
    %443 = vector.shape_cast %442 : vector<1x32x224xf32> to vector<32x224xf32>
    %444 = vector.extract_strided_slice %443 {offsets = [0, 192], sizes = [32, 32], strides = [1, 1]} : vector<32x224xf32> to vector<32x32xf32>
    %c18 = arith.constant 18 : index
    %c0_208 = arith.constant 0 : index
    %445 = vector.load %arg3[%c18, %c0_208] : memref<19x96xf32, #tpu.memory_space<vmem>>, vector<1x32xf32>
    %cst_209 = arith.constant dense<0.000000e+00> : vector<2x32xf32>
    %446 = tpu.matmul %441, %444, %cst_209 {dimension_numbers = #tpu.dot_dimension_numbers<[1], [0], [0], [1], [0, 0, 1, 1], [], []>} : vector<2x32xf32>, vector<32x32xf32>, vector<2x32xf32> -> vector<2x32xf32>
    %447 = vector.broadcast %445 : vector<1x32xf32> to vector<2x32xf32>
    %448 = arith.addf %446, %447 : vector<2x32xf32>
    %449 = math.tanh %448 : vector<2x32xf32>
    %c0_210 = arith.constant 0 : index
    %c0_211 = arith.constant 0 : index
    %450 = vector.load %arg6[%c0_210, %c0_211] : memref<2x32xf32, #tpu.memory_space<vmem>>, vector<2x32xf32>
    tpu.vector_store %arg6[%c0_210, %c0_211], %449 {strides = array<i32>} : memref<2x32xf32, #tpu.memory_space<vmem>>, vector<2x32xf32>,
    return
  }
  func.func @transform_0(%arg0: i32, %arg1: memref<2x8xi32, #tpu.memory_space<smem>>) -> (i32, i32) {
    %c0_i32 = arith.constant 0 : i32
    %c0_i32_0 = arith.constant 0 : i32
    %c0_i32_1 = arith.constant 0 : i32
    return %c0_i32, %c0_i32_0 : i32, i32
  }
  func.func @transform_1(%arg0: i32, %arg1: memref<2x8xi32, #tpu.memory_space<smem>>) -> (i32, i32) {
    %c0_i32 = arith.constant 0 : i32
    %c0_i32_0 = arith.constant 0 : i32
    %c0_i32_1 = arith.constant 0 : i32
    return %c0_i32, %c0_i32_0 : i32, i32
  }
  func.func @transform_2(%arg0: i32, %arg1: memref<2x8xi32, #tpu.memory_space<smem>>) -> (i32, i32, i32) {
    %c0_i32 = arith.constant 0 : i32
    %c0_i32_0 = arith.constant 0 : i32
    %c0_i32_1 = arith.constant 0 : i32
    %c0_i32_2 = arith.constant 0 : i32
    return %c0_i32, %c0_i32_0, %c0_i32_1 : i32, i32, i32
  }
  func.func @transform_3(%arg0: i32, %arg1: memref<2x8xi32, #tpu.memory_space<smem>>) -> (i32, i32, i32) {
    %c0_i32 = arith.constant 0 : i32
    %c0_i32_0 = arith.constant 0 : i32
    %c0_i32_1 = arith.constant 0 : i32
    %c0_i32_2 = arith.constant 0 : i32
    return %c0_i32, %c0_i32_0, %c0_i32_1 : i32, i32, i32
  }
  func.func @transform_4(%arg0: i32, %arg1: memref<2x8xi32, #tpu.memory_space<smem>>) -> (i32, i32) {
    %c0_i32 = arith.constant 0 : i32
    %c0_i32_0 = arith.constant 0 : i32
    %c0_i32_1 = arith.constant 0 : i32
    return %c0_i32, %c0_i32_0 : i32, i32
  }
}

</mosaic_0001>

<llo_original>
// kernel: bert_pre1_forward.1
$region0: #{bert_pre1_forward.1}
  #allocation0 [shape = 'u32[]', space=smem, size = 0x4, offset = 0x4, fixed_abs, tag = 'smem constant byte address 0x4 - core index']
  #allocation1 [shape = 'u32[72,128]{1,0:T(1,128)}', space=vmem, size = 0x9000, scoped, tag = 'internal scratch']
  #allocation2 [shape = 'f32[16,32]{1,0:T(8,128)}', space=vmem, size = 0x2000, scoped, tag = 'scratch operand']
  #allocation3 [shape = 'f32[16,32]{1,0:T(8,128)}', space=vmem, size = 0x2000, scoped, tag = 'scratch operand']
  #allocation4 [shape = 's32[1]{0}', space=sflag, size = 0x4, scoped, tag = 'scoped memory for bert_pre1_forward.1']
  #allocation5 [shape = 'u8[1024]{0}', space=smem, size = 0x400, scoped, tag = 'prefetched SMEM operand 0']
  %s0 = inlined_call_operand.vmem [shape: s32[2,8], index: 0, kind: input, shape index: {}]
  %s1 = inlined_call_operand.vmem [shape: f32[117,32], index: 1, kind: input, shape index: {}]
  %s2 = inlined_call_operand.vmem [shape: f32[19,96], index: 2, kind: input, shape index: {}]
  %s3 = inlined_call_operand.vmem [shape: f32[2,32,224], index: 3, kind: input, shape index: {}]
  %s4 = inlined_call_operand.vmem [shape: f32[2,64,32], index: 4, kind: input, shape index: {}]
  %s5 = inlined_call_operand.hbm [shape: f32[2,32], index: 5, kind: output, shape index: {}]
  %s6 = sld [smem:[#allocation0]]
  $region26: #{bert_pre1_forward.1} parent=0
    _
  %s8 = ssub.s32 1, %s6
  %s9 = scalar_select 0, %s8, %s6
  %s11 = sshll.u32 %s0, 4
  %s12 = int_to_ptr.vmem [resolvable:$true] %s11
  %14 = dma.vmem_to_smem %s12, 32, [#allocation5], [#allocation4]
  %16 = dma.done [#allocation4], 32
  %17 = sfence
  $region1: #{bert_pre1_forward.1} parent=0
    #allocation6 [shape = 'u8[1024]{0}', space=vmem, size = 0x400, scoped, tag = 'output window, operand 0, single buffered']
    #allocation7 [shape = 's32[1]{0}', space=sflag, size = 0x4, scoped, tag = 'scoped memory for bert_pre1_forward.1']
    %18 = vsyncpa [#allocation7], 0
    // Predicated region
    $region2: #{bert_pre1_forward.1} parent=1 // pred_check
      _
    $region3: #{bert_pre1_forward.1} parent=1 // pred_check_branch
      %20 = sbr.rel (0) target = $region5
    $region4: #{bert_pre1_forward.1} parent=1 // pred_region
      _
    $region5: #{bert_pre1_forward.1} parent=1 // pred_fallthru
      _
    // Predicated region
    $region6: #{bert_pre1_forward.1} parent=1 // pred_check
      _
    $region7: #{bert_pre1_forward.1} parent=1 // pred_check_branch
      %22 = sbr.rel (0) target = $region9
    $region8: #{bert_pre1_forward.1} parent=1 // pred_region
      _
    $region9: #{bert_pre1_forward.1} parent=1 // pred_fallthru
      _
    // Predicated region
    $region10: #{bert_pre1_forward.1} parent=1 // pred_check
      _
    $region11: #{bert_pre1_forward.1} parent=1 // pred_check_branch
      %24 = sbr.rel (0) target = $region13
    $region12: #{bert_pre1_forward.1} parent=1 // pred_region
      _
    $region13: #{bert_pre1_forward.1} parent=1 // pred_fallthru
      _
    // Predicated region
    $region14: #{bert_pre1_forward.1} parent=1 // pred_check
      _
    $region15: #{bert_pre1_forward.1} parent=1 // pred_check_branch
      %26 = sbr.rel (0) target = $region17
    $region16: #{bert_pre1_forward.1} parent=1 // pred_region
      _
    $region17: #{bert_pre1_forward.1} parent=1 // pred_fallthru
      _
    %s27 = sld [smem:[#allocation5]]
    %s28 = scalar_lea.vmem %s1, %s27
    %v29 = vld [vmem:[%s28] sm:$0x1]
    %vm30 = vcmask 253952
    %31 = vst.msk [vmem:[#allocation2] sm:$0x1] %vm30, %v29
    %s32 = sld [smem:[#allocation5 + $0x1]]
    %s33 = scalar_lea.vmem %s1, %s32
    %v34 = vld [vmem:[%s33] sm:$0x1]
    %35 = vst.msk [vmem:[#allocation2 + $0x1] sm:$0x1] %vm30, %v34
    %s36 = sld [smem:[#allocation5 + $0x2]]
    %s37 = scalar_lea.vmem %s1, %s36
    %v38 = vld [vmem:[%s37] sm:$0x1]
    %39 = vst.msk [vmem:[#allocation2 + $0x2] sm:$0x1] %vm30, %v38
    %s40 = sld [smem:[#allocation5 + $0x3]]
    %s41 = scalar_lea.vmem %s1, %s40
    %v42 = vld [vmem:[%s41] sm:$0x1]
    %43 = vst.msk [vmem:[#allocation2 + $0x3] sm:$0x1] %vm30, %v42
    %s44 = sld [smem:[#allocation5 + $0x4]]
    %s45 = scalar_lea.vmem %s1, %s44
    %v46 = vld [vmem:[%s45] sm:$0x1]
    %47 = vst.msk [vmem:[#allocation2 + $0x4] sm:$0x1] %vm30, %v46
    %s48 = sld [smem:[#allocation5 + $0x5]]
    %s49 = scalar_lea.vmem %s1, %s48
    %v50 = vld [vmem:[%s49] sm:$0x1]
    %51 = vst.msk [vmem:[#allocation2 + $0x5] sm:$0x1] %vm30, %v50
    %s52 = sld [smem:[#allocation5 + $0x6]]
    %s53 = scalar_lea.vmem %s1, %s52
    %v54 = vld [vmem:[%s53] sm:$0x1]
    %55 = vst.msk [vmem:[#allocation2 + $0x6] sm:$0x1] %vm30, %v54
    %s56 = sld [smem:[#allocation5 + $0x7]]
    %s57 = scalar_lea.vmem %s1, %s56
    %v58 = vld [vmem:[%s57] sm:$0x1]
    %59 = vst.msk [vmem:[#allocation2 + $0x7] sm:$0x1] %vm30, %v58
    %s60 = sld [smem:[#allocation5 + $0x80]]
    %s61 = scalar_lea.vmem %s1, %s60
    %v62 = vld [vmem:[%s61] sm:$0x1]
    %63 = vst.msk [vmem:[#allocation2 + $0x8] sm:$0x1] %vm30, %v62
    %s64 = sld [smem:[#allocation5 + $0x81]]
    %s65 = scalar_lea.vmem %s1, %s64
    %v66 = vld [vmem:[%s65] sm:$0x1]
    %67 = vst.msk [vmem:[#allocation2 + $0x9] sm:$0x1] %vm30, %v66
    %s68 = sld [smem:[#allocation5 + $0x82]]
    %s69 = scalar_lea.vmem %s1, %s68
    %v70 = vld [vmem:[%s69] sm:$0x1]
    %71 = vst.msk [vmem:[#allocation2 + $0xa] sm:$0x1] %vm30, %v70
    %s72 = sld [smem:[#allocation5 + $0x83]]
    %s73 = scalar_lea.vmem %s1, %s72
    %v74 = vld [vmem:[%s73] sm:$0x1]
    %75 = vst.msk [vmem:[#allocation2 + $0xb] sm:$0x1] %vm30, %v74
    %s76 = sld [smem:[#allocation5 + $0x84]]
    %s77 = scalar_lea.vmem %s1, %s76
    %v78 = vld [vmem:[%s77] sm:$0x1]
    %79 = vst.msk [vmem:[#allocation2 + $0xc] sm:$0x1] %vm30, %v78
    %s80 = sld [smem:[#allocation5 + $0x85]]
    %s81 = scalar_lea.vmem %s1, %s80
    %v82 = vld [vmem:[%s81] sm:$0x1]
    %83 = vst.msk [vmem:[#allocation2 + $0xd] sm:$0x1] %vm30, %v82
    %s84 = sld [smem:[#allocation5 + $0x86]]
    %s85 = scalar_lea.vmem %s1, %s84
    %v86 = vld [vmem:[%s85] sm:$0x1]
    %87 = vst.msk [vmem:[#allocation2 + $0xe] sm:$0x1] %vm30, %v86
    %s88 = sld [smem:[#allocation5 + $0x87]]
    %s89 = scalar_lea.vmem %s1, %s88
    %v90 = vld [vmem:[%s89] sm:$0x1]
    %91 = vst.msk [vmem:[#allocation2 + $0xf] sm:$0x1] %vm30, %v90
    %v92 = vld [vmem:[%s1 + $0x64] sm:$0xff]
    %v93 = vld [vmem:[%s1 + $0x74] sm:$0x1]
    %v94 = vperm.slane %v93, 0
    %v95 = vadd.f32 %v92, %v94
    %v96 = vld [vmem:[#allocation2] sm:$0xff]
    %v97 = vld [vmem:[#allocation2 + $0x8] sm:$0xff]
    %v98 = vadd.f32 %v96, %v95
    %v99 = vadd.f32 %v97, %v95
    %v100 = vld [vmem:[%s2] sm:$0x1]
    %v101 = vld [vmem:[%s2 + $0x1] sm:$0x1]
    %vm102 = vcmask 261120
    %v103 = vsel %vm102, %v98, 0.0
    %104 = vadd.xlane.f32.xlu0 %v103
    %v105 = vpop.xlane.xlu0 %104
    %v106 = vsel %vm102, %v99, 0.0
    %107 = vadd.xlane.f32.xlu0 %v106
    %v108 = vpop.xlane.xlu0 %107
    %v109 = vrcp.pop 32.0
    %v110 = vmul.f32 32.0, %v109
    %v111 = vsub.f32 1.0, %v110
    %v112 = vmul.f32 %v109, %v111
    %v113 = vadd.f32 %v109, %v112
    %vm114 = vweird.f32 %v109
    %v115 = vsel %vm114, %v109, %v113
    %v116 = vmul.f32 %v105, %v115
    %v117 = vmul.f32 %v108, %v115
    %v118 = vsub.f32 %v98, %v116
    %v119 = vsub.f32 %v99, %v117
    %v120 = vmul.f32 %v118, %v118
    %v121 = vmul.f32 %v119, %v119
    %v122 = vsel %vm102, %v120, 0.0
    %123 = vadd.xlane.f32.xlu0 %v122
    %v124 = vpop.xlane.xlu0 %123
    %v125 = vsel %vm102, %v121, 0.0
    %126 = vadd.xlane.f32.xlu0 %v125
    %v127 = vpop.xlane.xlu0 %126
    %v128 = vmul.f32 %v124, %v115
    %v129 = vmul.f32 %v127, %v115
    %v130 = vadd.f32 %v128, 1e-12
    %v131 = vadd.f32 %v129, 1e-12
    %v132 = vrsqrt.pop %v130
    %v133 = vmul.f32 %v132, %v130
    %v134 = vmul.f32 %v133, %v132
    %v135 = vmul.f32 0.5, %v134
    %v136 = vsub.f32 1.5, %v135
    %v137 = vmul.f32 %v132, %v136
    %vm138 = vweird.f32 %v130
    %vm139 = vweird.f32 %v132
    %vm140 = vmor %vm138, %vm139
    %v141 = vsel %vm140, %v132, %v137
    %v142 = vrsqrt.pop %v131
    %v143 = vmul.f32 %v142, %v131
    %v144 = vmul.f32 %v143, %v142
    %v145 = vmul.f32 0.5, %v144
    %v146 = vsub.f32 1.5, %v145
    %v147 = vmul.f32 %v142, %v146
    %vm148 = vweird.f32 %v131
    %vm149 = vweird.f32 %v142
    %vm150 = vmor %vm148, %vm149
    %v151 = vsel %vm150, %v142, %v147
    %v152 = vmul.f32 %v118, %v141
    %v153 = vmul.f32 %v119, %v151
    %v154 = vperm.slane %v100, 0
    %v155 = vmul.f32 %v152, %v154
    %v156 = vmul.f32 %v153, %v154
    %v157 = vperm.slane %v101, 0
    %v158 = vadd.f32 %v155, %v157
    %v159 = vadd.f32 %v156, %v157
    %v160 = vld [vmem:[%s3] sm:$0xff]
    %v161 = vld [vmem:[%s3 + $0x8] sm:$0xff]
    %v162 = vld [vmem:[%s3 + $0x10] sm:$0xff]
    %v163 = vld [vmem:[%s3 + $0x18] sm:$0xff]
    %v164 = vld [vmem:[%s3 + $0x20] sm:$0xff]
    %v165 = vld [vmem:[%s3 + $0x28] sm:$0xff]
    %v166 = vld [vmem:[%s3 + $0x30] sm:$0xff]
    %v167 = vld [vmem:[%s3 + $0x38] sm:$0xff]
    %v168 = vld [vmem:[%s4] sm:$0xff]
    %v169 = vld [vmem:[%s4 + $0x8] sm:$0xff]
    %v170 = vld [vmem:[%s4 + $0x10] sm:$0xff]
    %v171 = vld [vmem:[%s4 + $0x18] sm:$0xff]
    %v172 = vld [vmem:[%s4 + $0x20] sm:$0xff]
    %v173 = vld [vmem:[%s4 + $0x28] sm:$0xff]
    %v174 = vld [vmem:[%s4 + $0x30] sm:$0xff]
    %v175 = vld [vmem:[%s4 + $0x38] sm:$0xff]
    %v176 = vld [vmem:[%s2 + $0x2] sm:$0x1]
    %v177 = vperm.slane %v176, 0
    %v179 = vsel %vm102, %v158, 0
    %v182 = vsel %vm102, %v159, 0
    %184 = vmatpush.msra.mxu0 0.0
    %185 = vmatpush.msra.mxu0 0.0
    %186 = vmatpush.msra.mxu0 0.0
    %187 = vmatpush.msra.mxu0 0.0
    %188 = vmatpush.msra.mxu0 0.0
    %189 = vmatpush.msra.mxu0 0.0
    %190 = vmatpush.msra.mxu0 0.0
    %191 = vmatpush.msra.mxu0 0.0
    %192 = vmatpush.msra.mxu0 0.0
    %193 = vmatpush.msra.mxu0 0.0
    %194 = vmatpush.msra.mxu0 0.0
    %195 = vmatpush.msra.mxu0 0.0
    %196 = vmatpush.msra.mxu0 %v166
    %197 = vmatpush.msra.mxu0 %v164
    %198 = vmatpush.msra.mxu0 %v162
    %199 = vmatpush.msra.mxu0 %v160
    %200 = vmatmul.f32.gmra.mxu0 %v179
    %v201 = vpop.f32.mrf.mxu0
    %v202 = vadd.f32 %v177, %v201
    %203 = vmatmul.f32.gmra.mxu0 %v182
    %v204 = vpop.f32.mrf.mxu0
    %v205 = vadd.f32 %v177, %v204
    %206 = vdwg.mxu0
    %208 = vrot.lane.b32.xlu0 %v202, 96
    %v209 = vpop.permute.xlu0 %208
    %vm210 = vcmask 64512
    %v211 = vsel %vm210, %v202, 0
    %v213 = vsel %vm210, %v209, 0
    %215 = vmatpush.xpose.msra.mxu0 0.0
    %216 = vmatpush.xpose.msra.mxu0 0.0
    %217 = vmatpush.xpose.msra.mxu0 0.0
    %218 = vmatpush.xpose.msra.mxu0 0.0
    %219 = vmatpush.xpose.msra.mxu0 0.0
    %220 = vmatpush.xpose.msra.mxu0 0.0
    %221 = vmatpush.xpose.msra.mxu0 0.0
    %222 = vmatpush.xpose.msra.mxu0 0.0
    %223 = vmatpush.xpose.msra.mxu0 0.0
    %224 = vmatpush.xpose.msra.mxu0 0.0
    %225 = vmatpush.xpose.msra.mxu0 0.0
    %226 = vmatpush.xpose.msra.mxu0 0.0
    %227 = vmatpush.xpose.msra.mxu0 0.0
    %228 = vmatpush.xpose.msra.mxu0 0.0
    %229 = vmatpush.xpose.msra.mxu0 0.0
    %230 = vmatpush.xpose.msra.mxu0 %v213
    %231 = vmatmul.f32.gmra.mxu0 %v211
    %v232 = vpop.f32.mrf.mxu0
    %v233 = vadd.f32 0.0, %v232
    %234 = vdwg.mxu0
    %236 = vrot.lane.b32.xlu0 %v205, 96
    %v237 = vpop.permute.xlu0 %236
    %v238 = vsel %vm210, %v205, 0
    %v240 = vsel %vm210, %v237, 0
    %242 = vmatpush.xpose.msra.mxu0 0.0
    %243 = vmatpush.xpose.msra.mxu0 0.0
    %244 = vmatpush.xpose.msra.mxu0 0.0
    %245 = vmatpush.xpose.msra.mxu0 0.0
    %246 = vmatpush.xpose.msra.mxu0 0.0
    %247 = vmatpush.xpose.msra.mxu0 0.0
    %248 = vmatpush.xpose.msra.mxu0 0.0
    %249 = vmatpush.xpose.msra.mxu0 0.0
    %250 = vmatpush.xpose.msra.mxu0 0.0
    %251 = vmatpush.xpose.msra.mxu0 0.0
    %252 = vmatpush.xpose.msra.mxu0 0.0
    %253 = vmatpush.xpose.msra.mxu0 0.0
    %254 = vmatpush.xpose.msra.mxu0 0.0
    %255 = vmatpush.xpose.msra.mxu0 0.0
    %256 = vmatpush.xpose.msra.mxu0 0.0
    %257 = vmatpush.xpose.msra.mxu0 %v240
    %258 = vmatmul.f32.gmra.mxu0 %v238
    %v259 = vpop.f32.mrf.mxu0
    %v260 = vadd.f32 0.0, %v259
    %261 = vdwg.mxu0
    %v262 = vsel %vm210, %v233, -inf
    %263 = vmax.xlane.f32.xlu0 %v262
    %v264 = vpop.xlane.xlu0 %263
    %v265 = vsel %vm210, %v260, -inf
    %266 = vmax.xlane.f32.xlu0 %v265
    %v267 = vpop.xlane.xlu0 %266
    %v268 = vsub.f32 %v233, %v264
    %v269 = vsub.f32 %v260, %v267
    %v270 = vmul.f32 %v268, 1.442695
    %v271 = vpow.pop %v270
    %v272 = vmul.f32 %v269, 1.442695
    %v273 = vpow.pop %v272
    %v274 = vsel %vm210, %v271, 0.0
    %275 = vadd.xlane.f32.xlu0 %v274
    %v276 = vpop.xlane.xlu0 %275
    %v277 = vsel %vm210, %v273, 0.0
    %278 = vadd.xlane.f32.xlu0 %v277
    %v279 = vpop.xlane.xlu0 %278
    %v280 = vrcp.pop %v276
    %v281 = vrcp.pop %v279
    %v282 = vmul.f32 %v271, %v280
    %v283 = vmul.f32 %v273, %v281
    %284 = vrot.lane.b32.xlu0 %v202, 64
    %v285 = vpop.permute.xlu0 %284
    %v288 = vsel %vm210, %v282, 0
    %290 = vmatpush.msra.mxu0 0.0
    %291 = vmatpush.msra.mxu0 0.0
    %292 = vmatpush.msra.mxu0 0.0
    %293 = vmatpush.msra.mxu0 0.0
    %294 = vmatpush.msra.mxu0 0.0
    %295 = vmatpush.msra.mxu0 0.0
    %296 = vmatpush.msra.mxu0 0.0
    %297 = vmatpush.msra.mxu0 0.0
    %298 = vmatpush.msra.mxu0 0.0
    %299 = vmatpush.msra.mxu0 0.0
    %300 = vmatpush.msra.mxu0 0.0
    %301 = vmatpush.msra.mxu0 0.0
    %302 = vmatpush.msra.mxu0 0.0
    %303 = vmatpush.msra.mxu0 0.0
    %304 = vmatpush.msra.mxu0 0.0
    %305 = vmatpush.msra.mxu0 %v285
    %306 = vmatmul.f32.gmra.mxu0 %v288
    %v307 = vpop.f32.mrf.mxu0
    %v308 = vadd.f32 0.0, %v307
    %309 = vdwg.mxu0
    %310 = vrot.lane.b32.xlu0 %v205, 64
    %v311 = vpop.permute.xlu0 %310
    %v314 = vsel %vm210, %v283, 0
    %316 = vmatpush.msra.mxu0 0.0
    %317 = vmatpush.msra.mxu0 0.0
    %318 = vmatpush.msra.mxu0 0.0
    %319 = vmatpush.msra.mxu0 0.0
    %320 = vmatpush.msra.mxu0 0.0
    %321 = vmatpush.msra.mxu0 0.0
    %322 = vmatpush.msra.mxu0 0.0
    %323 = vmatpush.msra.mxu0 0.0
    %324 = vmatpush.msra.mxu0 0.0
    %325 = vmatpush.msra.mxu0 0.0
    %326 = vmatpush.msra.mxu0 0.0
    %327 = vmatpush.msra.mxu0 0.0
    %328 = vmatpush.msra.mxu0 0.0
    %329 = vmatpush.msra.mxu0 0.0
    %330 = vmatpush.msra.mxu0 0.0
    %331 = vmatpush.msra.mxu0 %v311
    %332 = vmatmul.f32.gmra.mxu0 %v314
    %v333 = vpop.f32.mrf.mxu0
    %v334 = vadd.f32 0.0, %v333
    %335 = vdwg.mxu0
    %336 = vst.msk [vmem:[#allocation3] sm:$0xff] %vm210, %v308
    %337 = vst.msk [vmem:[#allocation3 + $0x8] sm:$0xff] %vm210, %v334
    %338 = vrot.lane.b32.xlu0 %v202, 120
    %v339 = vpop.permute.xlu0 %338
    %340 = vrot.lane.b32.xlu0 %v202, 88
    %v341 = vpop.permute.xlu0 %340
    %v342 = vsel %vm210, %v339, 0
    %v344 = vsel %vm210, %v341, 0
    %346 = vmatpush.xpose.msra.mxu0 0.0
    %347 = vmatpush.xpose.msra.mxu0 0.0
    %348 = vmatpush.xpose.msra.mxu0 0.0
    %349 = vmatpush.xpose.msra.mxu0 0.0
    %350 = vmatpush.xpose.msra.mxu0 0.0
    %351 = vmatpush.xpose.msra.mxu0 0.0
    %352 = vmatpush.xpose.msra.mxu0 0.0
    %353 = vmatpush.xpose.msra.mxu0 0.0
    %354 = vmatpush.xpose.msra.mxu0 0.0
    %355 = vmatpush.xpose.msra.mxu0 0.0
    %356 = vmatpush.xpose.msra.mxu0 0.0
    %357 = vmatpush.xpose.msra.mxu0 0.0
    %358 = vmatpush.xpose.msra.mxu0 0.0
    %359 = vmatpush.xpose.msra.mxu0 0.0
    %360 = vmatpush.xpose.msra.mxu0 0.0
    %361 = vmatpush.xpose.msra.mxu0 %v344
    %362 = vmatmul.f32.gmra.mxu0 %v342
    %v363 = vpop.f32.mrf.mxu0
    %v364 = vadd.f32 0.0, %v363
    %365 = vdwg.mxu0
    %366 = vrot.lane.b32.xlu0 %v205, 120
    %v367 = vpop.permute.xlu0 %366
    %368 = vrot.lane.b32.xlu0 %v205, 88
    %v369 = vpop.permute.xlu0 %368
    %v370 = vsel %vm210, %v367, 0
    %v372 = vsel %vm210, %v369, 0
    %374 = vmatpush.xpose.msra.mxu0 0.0
    %375 = vmatpush.xpose.msra.mxu0 0.0
    %376 = vmatpush.xpose.msra.mxu0 0.0
    %377 = vmatpush.xpose.msra.mxu0 0.0
    %378 = vmatpush.xpose.msra.mxu0 0.0
    %379 = vmatpush.xpose.msra.mxu0 0.0
    %380 = vmatpush.xpose.msra.mxu0 0.0
    %381 = vmatpush.xpose.msra.mxu0 0.0
    %382 = vmatpush.xpose.msra.mxu0 0.0
    %383 = vmatpush.xpose.msra.mxu0 0.0
    %384 = vmatpush.xpose.msra.mxu0 0.0
    %385 = vmatpush.xpose.msra.mxu0 0.0
    %386 = vmatpush.xpose.msra.mxu0 0.0
    %387 = vmatpush.xpose.msra.mxu0 0.0
    %388 = vmatpush.xpose.msra.mxu0 0.0
    %389 = vmatpush.xpose.msra.mxu0 %v372
    %390 = vmatmul.f32.gmra.mxu0 %v370
    %v391 = vpop.f32.mrf.mxu0
    %v392 = vadd.f32 0.0, %v391
    %393 = vdwg.mxu0
    %v394 = vsel %vm210, %v364, -inf
    %395 = vmax.xlane.f32.xlu0 %v394
    %v396 = vpop.xlane.xlu0 %395
    %v397 = vsel %vm210, %v392, -inf
    %398 = vmax.xlane.f32.xlu0 %v397
    %v399 = vpop.xlane.xlu0 %398
    %v400 = vsub.f32 %v364, %v396
    %v401 = vsub.f32 %v392, %v399
    %v402 = vmul.f32 %v400, 1.442695
    %v403 = vpow.pop %v402
    %v404 = vmul.f32 %v401, 1.442695
    %v405 = vpow.pop %v404
    %v406 = vsel %vm210, %v403, 0.0
    %407 = vadd.xlane.f32.xlu0 %v406
    %v408 = vpop.xlane.xlu0 %407
    %v409 = vsel %vm210, %v405, 0.0
    %410 = vadd.xlane.f32.xlu0 %v409
    %v411 = vpop.xlane.xlu0 %410
    %v412 = vrcp.pop %v408
    %v413 = vrcp.pop %v411
    %v414 = vmul.f32 %v403, %v412
    %v415 = vmul.f32 %v405, %v413
    %416 = vrot.lane.b32.xlu0 %v202, 56
    %v417 = vpop.permute.xlu0 %416
    %v420 = vsel %vm210, %v414, 0
    %422 = vmatpush.msra.mxu0 0.0
    %423 = vmatpush.msra.mxu0 0.0
    %424 = vmatpush.msra.mxu0 0.0
    %425 = vmatpush.msra.mxu0 0.0
    %426 = vmatpush.msra.mxu0 0.0
    %427 = vmatpush.msra.mxu0 0.0
    %428 = vmatpush.msra.mxu0 0.0
    %429 = vmatpush.msra.mxu0 0.0
    %430 = vmatpush.msra.mxu0 0.0
    %431 = vmatpush.msra.mxu0 0.0
    %432 = vmatpush.msra.mxu0 0.0
    %433 = vmatpush.msra.mxu0 0.0
    %434 = vmatpush.msra.mxu0 0.0
    %435 = vmatpush.msra.mxu0 0.0
    %436 = vmatpush.msra.mxu0 0.0
    %437 = vmatpush.msra.mxu0 %v417
    %438 = vmatmul.f32.gmra.mxu0 %v420
    %v439 = vpop.f32.mrf.mxu0
    %v440 = vadd.f32 0.0, %v439
    %441 = vdwg.mxu0
    %442 = vrot.lane.b32.xlu0 %v205, 56
    %v443 = vpop.permute.xlu0 %442
    %v446 = vsel %vm210, %v415, 0
    %448 = vmatpush.msra.mxu0 0.0
    %449 = vmatpush.msra.mxu0 0.0
    %450 = vmatpush.msra.mxu0 0.0
    %451 = vmatpush.msra.mxu0 0.0
    %452 = vmatpush.msra.mxu0 0.0
    %453 = vmatpush.msra.mxu0 0.0
    %454 = vmatpush.msra.mxu0 0.0
    %455 = vmatpush.msra.mxu0 0.0
    %456 = vmatpush.msra.mxu0 0.0
    %457 = vmatpush.msra.mxu0 0.0
    %458 = vmatpush.msra.mxu0 0.0
    %459 = vmatpush.msra.mxu0 0.0
    %460 = vmatpush.msra.mxu0 0.0
    %461 = vmatpush.msra.mxu0 0.0
    %462 = vmatpush.msra.mxu0 0.0
    %463 = vmatpush.msra.mxu0 %v443
    %464 = vmatmul.f32.gmra.mxu0 %v446
    %v465 = vpop.f32.mrf.mxu0
    %v466 = vadd.f32 0.0, %v465
    %467 = vdwg.mxu0
    %470 = vrot.lane.b32.xlu0 %v440, 8
    %v471 = vpop.permute.xlu0 %470
    %472 = vrot.lane.b32.xlu0 %v466, 8
    %v473 = vpop.permute.xlu0 %472
    %vm476 = vcmask 130112
    %477 = vst.msk [vmem:[#allocation3] sm:$0xff] %vm476, %v471
    %478 = vst.msk [vmem:[#allocation3 + $0x8] sm:$0xff] %vm476, %v473
    %479 = vrot.lane.b32.xlu0 %v202, 112
    %v480 = vpop.permute.xlu0 %479
    %481 = vrot.lane.b32.xlu0 %v202, 80
    %v482 = vpop.permute.xlu0 %481
    %v483 = vsel %vm210, %v480, 0
    %v485 = vsel %vm210, %v482, 0
    %487 = vmatpush.xpose.msra.mxu0 0.0
    %488 = vmatpush.xpose.msra.mxu0 0.0
    %489 = vmatpush.xpose.msra.mxu0 0.0
    %490 = vmatpush.xpose.msra.mxu0 0.0
    %491 = vmatpush.xpose.msra.mxu0 0.0
    %492 = vmatpush.xpose.msra.mxu0 0.0
    %493 = vmatpush.xpose.msra.mxu0 0.0
    %494 = vmatpush.xpose.msra.mxu0 0.0
    %495 = vmatpush.xpose.msra.mxu0 0.0
    %496 = vmatpush.xpose.msra.mxu0 0.0
    %497 = vmatpush.xpose.msra.mxu0 0.0
    %498 = vmatpush.xpose.msra.mxu0 0.0
    %499 = vmatpush.xpose.msra.mxu0 0.0
    %500 = vmatpush.xpose.msra.mxu0 0.0
    %501 = vmatpush.xpose.msra.mxu0 0.0
    %502 = vmatpush.xpose.msra.mxu0 %v485
    %503 = vmatmul.f32.gmra.mxu0 %v483
    %v504 = vpop.f32.mrf.mxu0
    %v505 = vadd.f32 0.0, %v504
    %506 = vdwg.mxu0
    %507 = vrot.lane.b32.xlu0 %v205, 112
    %v508 = vpop.permute.xlu0 %507
    %509 = vrot.lane.b32.xlu0 %v205, 80
    %v510 = vpop.permute.xlu0 %509
    %v511 = vsel %vm210, %v508, 0
    %v513 = vsel %vm210, %v510, 0
    %515 = vmatpush.xpose.msra.mxu0 0.0
    %516 = vmatpush.xpose.msra.mxu0 0.0
    %517 = vmatpush.xpose.msra.mxu0 0.0
    %518 = vmatpush.xpose.msra.mxu0 0.0
    %519 = vmatpush.xpose.msra.mxu0 0.0
    %520 = vmatpush.xpose.msra.mxu0 0.0
    %521 = vmatpush.xpose.msra.mxu0 0.0
    %522 = vmatpush.xpose.msra.mxu0 0.0
    %523 = vmatpush.xpose.msra.mxu0 0.0
    %524 = vmatpush.xpose.msra.mxu0 0.0
    %525 = vmatpush.xpose.msra.mxu0 0.0
    %526 = vmatpush.xpose.msra.mxu0 0.0
    %527 = vmatpush.xpose.msra.mxu0 0.0
    %528 = vmatpush.xpose.msra.mxu0 0.0
    %529 = vmatpush.xpose.msra.mxu0 0.0
    %530 = vmatpush.xpose.msra.mxu0 %v513
    %531 = vmatmul.f32.gmra.mxu0 %v511
    %v532 = vpop.f32.mrf.mxu0
    %v533 = vadd.f32 0.0, %v532
    %534 = vdwg.mxu0
    %v535 = vsel %vm210, %v505, -inf
    %536 = vmax.xlane.f32.xlu0 %v535
    %v537 = vpop.xlane.xlu0 %536
    %v538 = vsel %vm210, %v533, -inf
    %539 = vmax.xlane.f32.xlu0 %v538
    %v540 = vpop.xlane.xlu0 %539
    %v541 = vsub.f32 %v505, %v537
    %v542 = vsub.f32 %v533, %v540
    %v543 = vmul.f32 %v541, 1.442695
    %v544 = vpow.pop %v543
    %v545 = vmul.f32 %v542, 1.442695
    %v546 = vpow.pop %v545
    %v547 = vsel %vm210, %v544, 0.0
    %548 = vadd.xlane.f32.xlu0 %v547
    %v549 = vpop.xlane.xlu0 %548
    %v550 = vsel %vm210, %v546, 0.0
    %551 = vadd.xlane.f32.xlu0 %v550
    %v552 = vpop.xlane.xlu0 %551
    %v553 = vrcp.pop %v549
    %v554 = vrcp.pop %v552
    %v555 = vmul.f32 %v544, %v553
    %v556 = vmul.f32 %v546, %v554
    %557 = vrot.lane.b32.xlu0 %v202, 48
    %v558 = vpop.permute.xlu0 %557
    %v561 = vsel %vm210, %v555, 0
    %563 = vmatpush.msra.mxu0 0.0
    %564 = vmatpush.msra.mxu0 0.0
    %565 = vmatpush.msra.mxu0 0.0
    %566 = vmatpush.msra.mxu0 0.0
    %567 = vmatpush.msra.mxu0 0.0
    %568 = vmatpush.msra.mxu0 0.0
    %569 = vmatpush.msra.mxu0 0.0
    %570 = vmatpush.msra.mxu0 0.0
    %571 = vmatpush.msra.mxu0 0.0
    %572 = vmatpush.msra.mxu0 0.0
    %573 = vmatpush.msra.mxu0 0.0
    %574 = vmatpush.msra.mxu0 0.0
    %575 = vmatpush.msra.mxu0 0.0
    %576 = vmatpush.msra.mxu0 0.0
    %577 = vmatpush.msra.mxu0 0.0
    %578 = vmatpush.msra.mxu0 %v558
    %579 = vmatmul.f32.gmra.mxu0 %v561
    %v580 = vpop.f32.mrf.mxu0
    %v581 = vadd.f32 0.0, %v580
    %582 = vdwg.mxu0
    %583 = vrot.lane.b32.xlu0 %v205, 48
    %v584 = vpop.permute.xlu0 %583
    %v587 = vsel %vm210, %v556, 0
    %589 = vmatpush.msra.mxu0 0.0
    %590 = vmatpush.msra.mxu0 0.0
    %591 = vmatpush.msra.mxu0 0.0
    %592 = vmatpush.msra.mxu0 0.0
    %593 = vmatpush.msra.mxu0 0.0
    %594 = vmatpush.msra.mxu0 0.0
    %595 = vmatpush.msra.mxu0 0.0
    %596 = vmatpush.msra.mxu0 0.0
    %597 = vmatpush.msra.mxu0 0.0
    %598 = vmatpush.msra.mxu0 0.0
    %599 = vmatpush.msra.mxu0 0.0
    %600 = vmatpush.msra.mxu0 0.0
    %601 = vmatpush.msra.mxu0 0.0
    %602 = vmatpush.msra.mxu0 0.0
    %603 = vmatpush.msra.mxu0 0.0
    %604 = vmatpush.msra.mxu0 %v584
    %605 = vmatmul.f32.gmra.mxu0 %v587
    %v606 = vpop.f32.mrf.mxu0
    %v607 = vadd.f32 0.0, %v606
    %608 = vdwg.mxu0
    %611 = vrot.lane.b32.xlu0 %v581, 16
    %v612 = vpop.permute.xlu0 %611
    %613 = vrot.lane.b32.xlu0 %v607, 16
    %v614 = vpop.permute.xlu0 %613
    %vm617 = vcmask 195712
    %618 = vst.msk [vmem:[#allocation3] sm:$0xff] %vm617, %v612
    %619 = vst.msk [vmem:[#allocation3 + $0x8] sm:$0xff] %vm617, %v614
    %620 = vrot.lane.b32.xlu0 %v202, 104
    %v621 = vpop.permute.xlu0 %620
    %622 = vrot.lane.b32.xlu0 %v202, 72
    %v623 = vpop.permute.xlu0 %622
    %v624 = vsel %vm210, %v621, 0
    %v626 = vsel %vm210, %v623, 0
    %628 = vmatpush.xpose.msra.mxu0 0.0
    %629 = vmatpush.xpose.msra.mxu0 0.0
    %630 = vmatpush.xpose.msra.mxu0 0.0
    %631 = vmatpush.xpose.msra.mxu0 0.0
    %632 = vmatpush.xpose.msra.mxu0 0.0
    %633 = vmatpush.xpose.msra.mxu0 0.0
    %634 = vmatpush.xpose.msra.mxu0 0.0
    %635 = vmatpush.xpose.msra.mxu0 0.0
    %636 = vmatpush.xpose.msra.mxu0 0.0
    %637 = vmatpush.xpose.msra.mxu0 0.0
    %638 = vmatpush.xpose.msra.mxu0 0.0
    %639 = vmatpush.xpose.msra.mxu0 0.0
    %640 = vmatpush.xpose.msra.mxu0 0.0
    %641 = vmatpush.xpose.msra.mxu0 0.0
    %642 = vmatpush.xpose.msra.mxu0 0.0
    %643 = vmatpush.xpose.msra.mxu0 %v626
    %644 = vmatmul.f32.gmra.mxu0 %v624
    %v645 = vpop.f32.mrf.mxu0
    %v646 = vadd.f32 0.0, %v645
    %647 = vdwg.mxu0
    %648 = vrot.lane.b32.xlu0 %v205, 104
    %v649 = vpop.permute.xlu0 %648
    %650 = vrot.lane.b32.xlu0 %v205, 72
    %v651 = vpop.permute.xlu0 %650
    %v652 = vsel %vm210, %v649, 0
    %v654 = vsel %vm210, %v651, 0
    %656 = vmatpush.xpose.msra.mxu0 0.0
    %657 = vmatpush.xpose.msra.mxu0 0.0
    %658 = vmatpush.xpose.msra.mxu0 0.0
    %659 = vmatpush.xpose.msra.mxu0 0.0
    %660 = vmatpush.xpose.msra.mxu0 0.0
    %661 = vmatpush.xpose.msra.mxu0 0.0
    %662 = vmatpush.xpose.msra.mxu0 0.0
    %663 = vmatpush.xpose.msra.mxu0 0.0
    %664 = vmatpush.xpose.msra.mxu0 0.0
    %665 = vmatpush.xpose.msra.mxu0 0.0
    %666 = vmatpush.xpose.msra.mxu0 0.0
    %667 = vmatpush.xpose.msra.mxu0 0.0
    %668 = vmatpush.xpose.msra.mxu0 0.0
    %669 = vmatpush.xpose.msra.mxu0 0.0
    %670 = vmatpush.xpose.msra.mxu0 0.0
    %671 = vmatpush.xpose.msra.mxu0 %v654
    %672 = vmatmul.f32.gmra.mxu0 %v652
    %v673 = vpop.f32.mrf.mxu0
    %v674 = vadd.f32 0.0, %v673
    %675 = vdwg.mxu0
    %v676 = vsel %vm210, %v646, -inf
    %677 = vmax.xlane.f32.xlu0 %v676
    %v678 = vpop.xlane.xlu0 %677
    %v679 = vsel %vm210, %v674, -inf
    %680 = vmax.xlane.f32.xlu0 %v679
    %v681 = vpop.xlane.xlu0 %680
    %v682 = vsub.f32 %v646, %v678
    %v683 = vsub.f32 %v674, %v681
    %v684 = vmul.f32 %v682, 1.442695
    %v685 = vpow.pop %v684
    %v686 = vmul.f32 %v683, 1.442695
    %v687 = vpow.pop %v686
    %v688 = vsel %vm210, %v685, 0.0
    %689 = vadd.xlane.f32.xlu0 %v688
    %v690 = vpop.xlane.xlu0 %689
    %v691 = vsel %vm210, %v687, 0.0
    %692 = vadd.xlane.f32.xlu0 %v691
    %v693 = vpop.xlane.xlu0 %692
    %v694 = vrcp.pop %v690
    %v695 = vrcp.pop %v693
    %v696 = vmul.f32 %v685, %v694
    %v697 = vmul.f32 %v687, %v695
    %698 = vrot.lane.b32.xlu0 %v202, 40
    %v699 = vpop.permute.xlu0 %698
    %v702 = vsel %vm210, %v696, 0
    %704 = vmatpush.msra.mxu0 0.0
    %705 = vmatpush.msra.mxu0 0.0
    %706 = vmatpush.msra.mxu0 0.0
    %707 = vmatpush.msra.mxu0 0.0
    %708 = vmatpush.msra.mxu0 0.0
    %709 = vmatpush.msra.mxu0 0.0
    %710 = vmatpush.msra.mxu0 0.0
    %711 = vmatpush.msra.mxu0 0.0
    %712 = vmatpush.msra.mxu0 0.0
    %713 = vmatpush.msra.mxu0 0.0
    %714 = vmatpush.msra.mxu0 0.0
    %715 = vmatpush.msra.mxu0 0.0
    %716 = vmatpush.msra.mxu0 0.0
    %717 = vmatpush.msra.mxu0 0.0
    %718 = vmatpush.msra.mxu0 0.0
    %719 = vmatpush.msra.mxu0 %v699
    %720 = vmatmul.f32.gmra.mxu0 %v702
    %v721 = vpop.f32.mrf.mxu0
    %v722 = vadd.f32 0.0, %v721
    %723 = vdwg.mxu0
    %724 = vrot.lane.b32.xlu0 %v205, 40
    %v725 = vpop.permute.xlu0 %724
    %v728 = vsel %vm210, %v697, 0
    %730 = vmatpush.msra.mxu0 0.0
    %731 = vmatpush.msra.mxu0 0.0
    %732 = vmatpush.msra.mxu0 0.0
    %733 = vmatpush.msra.mxu0 0.0
    %734 = vmatpush.msra.mxu0 0.0
    %735 = vmatpush.msra.mxu0 0.0
    %736 = vmatpush.msra.mxu0 0.0
    %737 = vmatpush.msra.mxu0 0.0
    %738 = vmatpush.msra.mxu0 0.0
    %739 = vmatpush.msra.mxu0 0.0
    %740 = vmatpush.msra.mxu0 0.0
    %741 = vmatpush.msra.mxu0 0.0
    %742 = vmatpush.msra.mxu0 0.0
    %743 = vmatpush.msra.mxu0 0.0
    %744 = vmatpush.msra.mxu0 0.0
    %745 = vmatpush.msra.mxu0 %v725
    %746 = vmatmul.f32.gmra.mxu0 %v728
    %v747 = vpop.f32.mrf.mxu0
    %v748 = vadd.f32 0.0, %v747
    %749 = vdwg.mxu0
    %752 = vrot.lane.b32.xlu0 %v722, 24
    %v753 = vpop.permute.xlu0 %752
    %754 = vrot.lane.b32.xlu0 %v748, 24
    %v755 = vpop.permute.xlu0 %754
    %vm758 = vcmask 261312
    %759 = vst.msk [vmem:[#allocation3] sm:$0xff] %vm758, %v753
    %760 = vst.msk [vmem:[#allocation3 + $0x8] sm:$0xff] %vm758, %v755
    %v761 = vld [vmem:[#allocation3] sm:$0xff]
    %v762 = vld [vmem:[#allocation3 + $0x8] sm:$0xff]
    %v763 = vld [vmem:[%s2 + $0x3] sm:$0x1]
    %v764 = vperm.slane %v763, 0
    %769 = vrot.lane.b32.xlu0 %v160, 32
    %v770 = vpop.permute.xlu0 %769
    %771 = vrot.lane.b32.xlu0 %v162, 32
    %v772 = vpop.permute.xlu0 %771
    %773 = vrot.lane.b32.xlu0 %v164, 32
    %v774 = vpop.permute.xlu0 %773
    %775 = vrot.lane.b32.xlu0 %v166, 32
    %v776 = vpop.permute.xlu0 %775
    %v782 = vsel %vm102, %v761, 0
    %v785 = vsel %vm102, %v762, 0
    %787 = vmatpush.msra.mxu0 0.0
    %788 = vmatpush.msra.mxu0 0.0
    %789 = vmatpush.msra.mxu0 0.0
    %790 = vmatpush.msra.mxu0 0.0
    %791 = vmatpush.msra.mxu0 0.0
    %792 = vmatpush.msra.mxu0 0.0
    %793 = vmatpush.msra.mxu0 0.0
    %794 = vmatpush.msra.mxu0 0.0
    %795 = vmatpush.msra.mxu0 0.0
    %796 = vmatpush.msra.mxu0 0.0
    %797 = vmatpush.msra.mxu0 0.0
    %798 = vmatpush.msra.mxu0 0.0
    %799 = vmatpush.msra.mxu0 %v776
    %800 = vmatpush.msra.mxu0 %v774
    %801 = vmatpush.msra.mxu0 %v772
    %802 = vmatpush.msra.mxu0 %v770
    %803 = vmatmul.f32.gmra.mxu0 %v782
    %v804 = vpop.f32.mrf.mxu0
    %v805 = vadd.f32 %v764, %v804
    %806 = vmatmul.f32.gmra.mxu0 %v785
    %v807 = vpop.f32.mrf.mxu0
    %v808 = vadd.f32 %v764, %v807
    %809 = vdwg.mxu0
    %v810 = vadd.f32 %v805, %v158
    %v811 = vadd.f32 %v808, %v159
    %v812 = vld [vmem:[%s2 + $0x4] sm:$0x1]
    %v813 = vld [vmem:[%s2 + $0x5] sm:$0x1]
    %v814 = vsel %vm102, %v810, 0.0
    %815 = vadd.xlane.f32.xlu0 %v814
    %v816 = vpop.xlane.xlu0 %815
    %v817 = vsel %vm102, %v811, 0.0
    %818 = vadd.xlane.f32.xlu0 %v817
    %v819 = vpop.xlane.xlu0 %818
    %v820 = vmul.f32 %v816, %v115
    %v821 = vmul.f32 %v819, %v115
    %v822 = vsub.f32 %v810, %v820
    %v823 = vsub.f32 %v811, %v821
    %v824 = vmul.f32 %v822, %v822
    %v825 = vmul.f32 %v823, %v823
    %v826 = vsel %vm102, %v824, 0.0
    %827 = vadd.xlane.f32.xlu0 %v826
    %v828 = vpop.xlane.xlu0 %827
    %v829 = vsel %vm102, %v825, 0.0
    %830 = vadd.xlane.f32.xlu0 %v829
    %v831 = vpop.xlane.xlu0 %830
    %v832 = vmul.f32 %v828, %v115
    %v833 = vmul.f32 %v831, %v115
    %v834 = vadd.f32 %v832, 1e-12
    %v835 = vadd.f32 %v833, 1e-12
    %v836 = vrsqrt.pop %v834
    %v837 = vmul.f32 %v836, %v834
    %v838 = vmul.f32 %v837, %v836
    %v839 = vmul.f32 0.5, %v838
    %v840 = vsub.f32 1.5, %v839
    %v841 = vmul.f32 %v836, %v840
    %vm842 = vweird.f32 %v834
    %vm843 = vweird.f32 %v836
    %vm844 = vmor %vm842, %vm843
    %v845 = vsel %vm844, %v836, %v841
    %v846 = vrsqrt.pop %v835
    %v847 = vmul.f32 %v846, %v835
    %v848 = vmul.f32 %v847, %v846
    %v849 = vmul.f32 0.5, %v848
    %v850 = vsub.f32 1.5, %v849
    %v851 = vmul.f32 %v846, %v850
    %vm852 = vweird.f32 %v835
    %vm853 = vweird.f32 %v846
    %vm854 = vmor %vm852, %vm853
    %v855 = vsel %vm854, %v846, %v851
    %v856 = vmul.f32 %v822, %v845
    %v857 = vmul.f32 %v823, %v855
    %v858 = vperm.slane %v812, 0
    %v859 = vmul.f32 %v856, %v858
    %v860 = vmul.f32 %v857, %v858
    %v861 = vperm.slane %v813, 0
    %v862 = vadd.f32 %v859, %v861
    %v863 = vadd.f32 %v860, %v861
    %v864 = vld [vmem:[%s2 + $0x6] sm:$0x1]
    %v865 = vperm.slane %v864, 0
    %v867 = vsel %vm102, %v862, 0
    %v870 = vsel %vm102, %v863, 0
    %872 = vmatpush.msra.mxu0 0.0
    %873 = vmatpush.msra.mxu0 0.0
    %874 = vmatpush.msra.mxu0 0.0
    %875 = vmatpush.msra.mxu0 0.0
    %876 = vmatpush.msra.mxu0 0.0
    %877 = vmatpush.msra.mxu0 0.0
    %878 = vmatpush.msra.mxu0 0.0
    %879 = vmatpush.msra.mxu0 0.0
    %880 = vmatpush.msra.mxu0 0.0
    %881 = vmatpush.msra.mxu0 0.0
    %882 = vmatpush.msra.mxu0 0.0
    %883 = vmatpush.msra.mxu0 0.0
    %884 = vmatpush.msra.mxu0 %v167
    %885 = vmatpush.msra.mxu0 %v165
    %886 = vmatpush.msra.mxu0 %v163
    %887 = vmatpush.msra.mxu0 %v161
    %888 = vmatmul.f32.gmra.mxu0 %v867
    %v889 = vpop.f32.mrf.mxu0
    %v890 = vadd.f32 %v865, %v889
    %891 = vmatmul.f32.gmra.mxu0 %v870
    %v892 = vpop.f32.mrf.mxu0
    %v893 = vadd.f32 %v865, %v892
    %894 = vdwg.mxu0
    %v895 = vmul.f32 %v890, 0.5
    %v896 = vmul.f32 %v893, 0.5
    %v897 = vmul.f32 %v890, 0.044715
    %v898 = vmul.f32 %v893, 0.044715
    %v899 = vmul.f32 %v897, %v890
    %v900 = vmul.f32 %v898, %v893
    %v901 = vmul.f32 %v899, %v890
    %v902 = vmul.f32 %v900, %v893
    %v903 = vadd.f32 %v890, %v901
    %v904 = vadd.f32 %v893, %v902
    %v905 = vmul.f32 %v903, 0.7978846
    %v906 = vmul.f32 %v904, 0.7978846
    %v907 = vtanh.pop %v905
    %v908 = vtanh.pop %v906
    %v909 = vadd.f32 %v907, 1.0
    %v910 = vadd.f32 %v908, 1.0
    %v911 = vmul.f32 %v895, %v909
    %v912 = vmul.f32 %v896, %v910
    %v913 = vld [vmem:[%s2 + $0x7] sm:$0x1]
    %v914 = vperm.slane %v913, 0
    %vm915 = vcmask 523264
    %v917 = vsel %vm915, %v911, 0
    %v920 = vsel %vm915, %v912, 0
    %922 = vmatpush.msra.mxu0 0.0
    %923 = vmatpush.msra.mxu0 0.0
    %924 = vmatpush.msra.mxu0 0.0
    %925 = vmatpush.msra.mxu0 0.0
    %926 = vmatpush.msra.mxu0 0.0
    %927 = vmatpush.msra.mxu0 0.0
    %928 = vmatpush.msra.mxu0 0.0
    %929 = vmatpush.msra.mxu0 0.0
    %930 = vmatpush.msra.mxu0 %v175
    %931 = vmatpush.msra.mxu0 %v174
    %932 = vmatpush.msra.mxu0 %v173
    %933 = vmatpush.msra.mxu0 %v172
    %934 = vmatpush.msra.mxu0 %v171
    %935 = vmatpush.msra.mxu0 %v170
    %936 = vmatpush.msra.mxu0 %v169
    %937 = vmatpush.msra.mxu0 %v168
    %938 = vmatmul.f32.gmra.mxu0 %v917
    %v939 = vpop.f32.mrf.mxu0
    %v940 = vadd.f32 %v914, %v939
    %941 = vmatmul.f32.gmra.mxu0 %v920
    %v942 = vpop.f32.mrf.mxu0
    %v943 = vadd.f32 %v914, %v942
    %944 = vdwg.mxu0
    %v945 = vadd.f32 %v940, %v862
    %v946 = vadd.f32 %v943, %v863
    %v947 = vld [vmem:[%s2 + $0x8] sm:$0x1]
    %v948 = vld [vmem:[%s2 + $0x9] sm:$0x1]
    %v949 = vsel %vm102, %v945, 0.0
    %950 = vadd.xlane.f32.xlu0 %v949
    %v951 = vpop.xlane.xlu0 %950
    %v952 = vsel %vm102, %v946, 0.0
    %953 = vadd.xlane.f32.xlu0 %v952
    %v954 = vpop.xlane.xlu0 %953
    %v955 = vmul.f32 %v951, %v115
    %v956 = vmul.f32 %v954, %v115
    %v957 = vsub.f32 %v945, %v955
    %v958 = vsub.f32 %v946, %v956
    %v959 = vmul.f32 %v957, %v957
    %v960 = vmul.f32 %v958, %v958
    %v961 = vsel %vm102, %v959, 0.0
    %962 = vadd.xlane.f32.xlu0 %v961
    %v963 = vpop.xlane.xlu0 %962
    %v964 = vsel %vm102, %v960, 0.0
    %965 = vadd.xlane.f32.xlu0 %v964
    %v966 = vpop.xlane.xlu0 %965
    %v967 = vmul.f32 %v963, %v115
    %v968 = vmul.f32 %v966, %v115
    %v969 = vadd.f32 %v967, 1e-12
    %v970 = vadd.f32 %v968, 1e-12
    %v971 = vrsqrt.pop %v969
    %v972 = vmul.f32 %v971, %v969
    %v973 = vmul.f32 %v972, %v971
    %v974 = vmul.f32 0.5, %v973
    %v975 = vsub.f32 1.5, %v974
    %v976 = vmul.f32 %v971, %v975
    %vm977 = vweird.f32 %v969
    %vm978 = vweird.f32 %v971
    %vm979 = vmor %vm977, %vm978
    %v980 = vsel %vm979, %v971, %v976
    %v981 = vrsqrt.pop %v970
    %v982 = vmul.f32 %v981, %v970
    %v983 = vmul.f32 %v982, %v981
    %v984 = vmul.f32 0.5, %v983
    %v985 = vsub.f32 1.5, %v984
    %v986 = vmul.f32 %v981, %v985
    %vm987 = vweird.f32 %v970
    %vm988 = vweird.f32 %v981
    %vm989 = vmor %vm987, %vm988
    %v990 = vsel %vm989, %v981, %v986
    %v991 = vmul.f32 %v957, %v980
    %v992 = vmul.f32 %v958, %v990
    %v993 = vperm.slane %v947, 0
    %v994 = vmul.f32 %v991, %v993
    %v995 = vmul.f32 %v992, %v993
    %v996 = vperm.slane %v948, 0
    %v997 = vadd.f32 %v994, %v996
    %v998 = vadd.f32 %v995, %v996
    %s999 = scalar_lea.vmem %s3, 64
    %v1000 = vld [vmem:[%s999] sm:$0xff]
    %v1001 = vld [vmem:[%s999 + $0x8] sm:$0xff]
    %v1002 = vld [vmem:[%s999 + $0x10] sm:$0xff]
    %v1003 = vld [vmem:[%s999 + $0x18] sm:$0xff]
    %v1004 = vld [vmem:[%s999 + $0x20] sm:$0xff]
    %v1005 = vld [vmem:[%s999 + $0x28] sm:$0xff]
    %v1006 = vld [vmem:[%s999 + $0x30] sm:$0xff]
    %v1007 = vld [vmem:[%s999 + $0x38] sm:$0xff]
    %s1008 = scalar_lea.vmem %s4, 64
    %v1009 = vld [vmem:[%s1008] sm:$0xff]
    %v1010 = vld [vmem:[%s1008 + $0x8] sm:$0xff]
    %v1011 = vld [vmem:[%s1008 + $0x10] sm:$0xff]
    %v1012 = vld [vmem:[%s1008 + $0x18] sm:$0xff]
    %v1013 = vld [vmem:[%s1008 + $0x20] sm:$0xff]
    %v1014 = vld [vmem:[%s1008 + $0x28] sm:$0xff]
    %v1015 = vld [vmem:[%s1008 + $0x30] sm:$0xff]
    %v1016 = vld [vmem:[%s1008 + $0x38] sm:$0xff]
    %v1017 = vld [vmem:[%s2 + $0xa] sm:$0x1]
    %v1018 = vperm.slane %v1017, 0
    %v1020 = vsel %vm102, %v997, 0
    %v1023 = vsel %vm102, %v998, 0
    %1025 = vmatpush.msra.mxu0 0.0
    %1026 = vmatpush.msra.mxu0 0.0
    %1027 = vmatpush.msra.mxu0 0.0
    %1028 = vmatpush.msra.mxu0 0.0
    %1029 = vmatpush.msra.mxu0 0.0
    %1030 = vmatpush.msra.mxu0 0.0
    %1031 = vmatpush.msra.mxu0 0.0
    %1032 = vmatpush.msra.mxu0 0.0
    %1033 = vmatpush.msra.mxu0 0.0
    %1034 = vmatpush.msra.mxu0 0.0
    %1035 = vmatpush.msra.mxu0 0.0
    %1036 = vmatpush.msra.mxu0 0.0
    %1037 = vmatpush.msra.mxu0 %v1006
    %1038 = vmatpush.msra.mxu0 %v1004
    %1039 = vmatpush.msra.mxu0 %v1002
    %1040 = vmatpush.msra.mxu0 %v1000
    %1041 = vmatmul.f32.gmra.mxu0 %v1020
    %v1042 = vpop.f32.mrf.mxu0
    %v1043 = vadd.f32 %v1018, %v1042
    %1044 = vmatmul.f32.gmra.mxu0 %v1023
    %v1045 = vpop.f32.mrf.mxu0
    %v1046 = vadd.f32 %v1018, %v1045
    %1047 = vdwg.mxu0
    %1049 = vrot.lane.b32.xlu0 %v1043, 96
    %v1050 = vpop.permute.xlu0 %1049
    %v1051 = vsel %vm210, %v1043, 0
    %v1053 = vsel %vm210, %v1050, 0
    %1055 = vmatpush.xpose.msra.mxu0 0.0
    %1056 = vmatpush.xpose.msra.mxu0 0.0
    %1057 = vmatpush.xpose.msra.mxu0 0.0
    %1058 = vmatpush.xpose.msra.mxu0 0.0
    %1059 = vmatpush.xpose.msra.mxu0 0.0
    %1060 = vmatpush.xpose.msra.mxu0 0.0
    %1061 = vmatpush.xpose.msra.mxu0 0.0
    %1062 = vmatpush.xpose.msra.mxu0 0.0
    %1063 = vmatpush.xpose.msra.mxu0 0.0
    %1064 = vmatpush.xpose.msra.mxu0 0.0
    %1065 = vmatpush.xpose.msra.mxu0 0.0
    %1066 = vmatpush.xpose.msra.mxu0 0.0
    %1067 = vmatpush.xpose.msra.mxu0 0.0
    %1068 = vmatpush.xpose.msra.mxu0 0.0
    %1069 = vmatpush.xpose.msra.mxu0 0.0
    %1070 = vmatpush.xpose.msra.mxu0 %v1053
    %1071 = vmatmul.f32.gmra.mxu0 %v1051
    %v1072 = vpop.f32.mrf.mxu0
    %v1073 = vadd.f32 0.0, %v1072
    %1074 = vdwg.mxu0
    %1076 = vrot.lane.b32.xlu0 %v1046, 96
    %v1077 = vpop.permute.xlu0 %1076
    %v1078 = vsel %vm210, %v1046, 0
    %v1080 = vsel %vm210, %v1077, 0
    %1082 = vmatpush.xpose.msra.mxu0 0.0
    %1083 = vmatpush.xpose.msra.mxu0 0.0
    %1084 = vmatpush.xpose.msra.mxu0 0.0
    %1085 = vmatpush.xpose.msra.mxu0 0.0
    %1086 = vmatpush.xpose.msra.mxu0 0.0
    %1087 = vmatpush.xpose.msra.mxu0 0.0
    %1088 = vmatpush.xpose.msra.mxu0 0.0
    %1089 = vmatpush.xpose.msra.mxu0 0.0
    %1090 = vmatpush.xpose.msra.mxu0 0.0
    %1091 = vmatpush.xpose.msra.mxu0 0.0
    %1092 = vmatpush.xpose.msra.mxu0 0.0
    %1093 = vmatpush.xpose.msra.mxu0 0.0
    %1094 = vmatpush.xpose.msra.mxu0 0.0
    %1095 = vmatpush.xpose.msra.mxu0 0.0
    %1096 = vmatpush.xpose.msra.mxu0 0.0
    %1097 = vmatpush.xpose.msra.mxu0 %v1080
    %1098 = vmatmul.f32.gmra.mxu0 %v1078
    %v1099 = vpop.f32.mrf.mxu0
    %v1100 = vadd.f32 0.0, %v1099
    %1101 = vdwg.mxu0
    %v1102 = vsel %vm210, %v1073, -inf
    %1103 = vmax.xlane.f32.xlu0 %v1102
    %v1104 = vpop.xlane.xlu0 %1103
    %v1105 = vsel %vm210, %v1100, -inf
    %1106 = vmax.xlane.f32.xlu0 %v1105
    %v1107 = vpop.xlane.xlu0 %1106
    %v1108 = vsub.f32 %v1073, %v1104
    %v1109 = vsub.f32 %v1100, %v1107
    %v1110 = vmul.f32 %v1108, 1.442695
    %v1111 = vpow.pop %v1110
    %v1112 = vmul.f32 %v1109, 1.442695
    %v1113 = vpow.pop %v1112
    %v1114 = vsel %vm210, %v1111, 0.0
    %1115 = vadd.xlane.f32.xlu0 %v1114
    %v1116 = vpop.xlane.xlu0 %1115
    %v1117 = vsel %vm210, %v1113, 0.0
    %1118 = vadd.xlane.f32.xlu0 %v1117
    %v1119 = vpop.xlane.xlu0 %1118
    %v1120 = vrcp.pop %v1116
    %v1121 = vrcp.pop %v1119
    %v1122 = vmul.f32 %v1111, %v1120
    %v1123 = vmul.f32 %v1113, %v1121
    %1124 = vrot.lane.b32.xlu0 %v1043, 64
    %v1125 = vpop.permute.xlu0 %1124
    %v1128 = vsel %vm210, %v1122, 0
    %1130 = vmatpush.msra.mxu0 0.0
    %1131 = vmatpush.msra.mxu0 0.0
    %1132 = vmatpush.msra.mxu0 0.0
    %1133 = vmatpush.msra.mxu0 0.0
    %1134 = vmatpush.msra.mxu0 0.0
    %1135 = vmatpush.msra.mxu0 0.0
    %1136 = vmatpush.msra.mxu0 0.0
    %1137 = vmatpush.msra.mxu0 0.0
    %1138 = vmatpush.msra.mxu0 0.0
    %1139 = vmatpush.msra.mxu0 0.0
    %1140 = vmatpush.msra.mxu0 0.0
    %1141 = vmatpush.msra.mxu0 0.0
    %1142 = vmatpush.msra.mxu0 0.0
    %1143 = vmatpush.msra.mxu0 0.0
    %1144 = vmatpush.msra.mxu0 0.0
    %1145 = vmatpush.msra.mxu0 %v1125
    %1146 = vmatmul.f32.gmra.mxu0 %v1128
    %v1147 = vpop.f32.mrf.mxu0
    %v1148 = vadd.f32 0.0, %v1147
    %1149 = vdwg.mxu0
    %1150 = vrot.lane.b32.xlu0 %v1046, 64
    %v1151 = vpop.permute.xlu0 %1150
    %v1154 = vsel %vm210, %v1123, 0
    %1156 = vmatpush.msra.mxu0 0.0
    %1157 = vmatpush.msra.mxu0 0.0
    %1158 = vmatpush.msra.mxu0 0.0
    %1159 = vmatpush.msra.mxu0 0.0
    %1160 = vmatpush.msra.mxu0 0.0
    %1161 = vmatpush.msra.mxu0 0.0
    %1162 = vmatpush.msra.mxu0 0.0
    %1163 = vmatpush.msra.mxu0 0.0
    %1164 = vmatpush.msra.mxu0 0.0
    %1165 = vmatpush.msra.mxu0 0.0
    %1166 = vmatpush.msra.mxu0 0.0
    %1167 = vmatpush.msra.mxu0 0.0
    %1168 = vmatpush.msra.mxu0 0.0
    %1169 = vmatpush.msra.mxu0 0.0
    %1170 = vmatpush.msra.mxu0 0.0
    %1171 = vmatpush.msra.mxu0 %v1151
    %1172 = vmatmul.f32.gmra.mxu0 %v1154
    %v1173 = vpop.f32.mrf.mxu0
    %v1174 = vadd.f32 0.0, %v1173
    %1175 = vdwg.mxu0
    %1176 = vst.msk [vmem:[#allocation3] sm:$0xff] %vm210, %v1148
    %1177 = vst.msk [vmem:[#allocation3 + $0x8] sm:$0xff] %vm210, %v1174
    %1178 = vrot.lane.b32.xlu0 %v1043, 120
    %v1179 = vpop.permute.xlu0 %1178
    %1180 = vrot.lane.b32.xlu0 %v1043, 88
    %v1181 = vpop.permute.xlu0 %1180
    %v1182 = vsel %vm210, %v1179, 0
    %v1184 = vsel %vm210, %v1181, 0
    %1186 = vmatpush.xpose.msra.mxu0 0.0
    %1187 = vmatpush.xpose.msra.mxu0 0.0
    %1188 = vmatpush.xpose.msra.mxu0 0.0
    %1189 = vmatpush.xpose.msra.mxu0 0.0
    %1190 = vmatpush.xpose.msra.mxu0 0.0
    %1191 = vmatpush.xpose.msra.mxu0 0.0
    %1192 = vmatpush.xpose.msra.mxu0 0.0
    %1193 = vmatpush.xpose.msra.mxu0 0.0
    %1194 = vmatpush.xpose.msra.mxu0 0.0
    %1195 = vmatpush.xpose.msra.mxu0 0.0
    %1196 = vmatpush.xpose.msra.mxu0 0.0
    %1197 = vmatpush.xpose.msra.mxu0 0.0
    %1198 = vmatpush.xpose.msra.mxu0 0.0
    %1199 = vmatpush.xpose.msra.mxu0 0.0
    %1200 = vmatpush.xpose.msra.mxu0 0.0
    %1201 = vmatpush.xpose.msra.mxu0 %v1184
    %1202 = vmatmul.f32.gmra.mxu0 %v1182
    %v1203 = vpop.f32.mrf.mxu0
    %v1204 = vadd.f32 0.0, %v1203
    %1205 = vdwg.mxu0
    %1206 = vrot.lane.b32.xlu0 %v1046, 120
    %v1207 = vpop.permute.xlu0 %1206
    %1208 = vrot.lane.b32.xlu0 %v1046, 88
    %v1209 = vpop.permute.xlu0 %1208
    %v1210 = vsel %vm210, %v1207, 0
    %v1212 = vsel %vm210, %v1209, 0
    %1214 = vmatpush.xpose.msra.mxu0 0.0
    %1215 = vmatpush.xpose.msra.mxu0 0.0
    %1216 = vmatpush.xpose.msra.mxu0 0.0
    %1217 = vmatpush.xpose.msra.mxu0 0.0
    %1218 = vmatpush.xpose.msra.mxu0 0.0
    %1219 = vmatpush.xpose.msra.mxu0 0.0
    %1220 = vmatpush.xpose.msra.mxu0 0.0
    %1221 = vmatpush.xpose.msra.mxu0 0.0
    %1222 = vmatpush.xpose.msra.mxu0 0.0
    %1223 = vmatpush.xpose.msra.mxu0 0.0
    %1224 = vmatpush.xpose.msra.mxu0 0.0
    %1225 = vmatpush.xpose.msra.mxu0 0.0
    %1226 = vmatpush.xpose.msra.mxu0 0.0
    %1227 = vmatpush.xpose.msra.mxu0 0.0
    %1228 = vmatpush.xpose.msra.mxu0 0.0
    %1229 = vmatpush.xpose.msra.mxu0 %v1212
    %1230 = vmatmul.f32.gmra.mxu0 %v1210
    %v1231 = vpop.f32.mrf.mxu0
    %v1232 = vadd.f32 0.0, %v1231
    %1233 = vdwg.mxu0
    %v1234 = vsel %vm210, %v1204, -inf
    %1235 = vmax.xlane.f32.xlu0 %v1234
    %v1236 = vpop.xlane.xlu0 %1235
    %v1237 = vsel %vm210, %v1232, -inf
    %1238 = vmax.xlane.f32.xlu0 %v1237
    %v1239 = vpop.xlane.xlu0 %1238
    %v1240 = vsub.f32 %v1204, %v1236
    %v1241 = vsub.f32 %v1232, %v1239
    %v1242 = vmul.f32 %v1240, 1.442695
    %v1243 = vpow.pop %v1242
    %v1244 = vmul.f32 %v1241, 1.442695
    %v1245 = vpow.pop %v1244
    %v1246 = vsel %vm210, %v1243, 0.0
    %1247 = vadd.xlane.f32.xlu0 %v1246
    %v1248 = vpop.xlane.xlu0 %1247
    %v1249 = vsel %vm210, %v1245, 0.0
    %1250 = vadd.xlane.f32.xlu0 %v1249
    %v1251 = vpop.xlane.xlu0 %1250
    %v1252 = vrcp.pop %v1248
    %v1253 = vrcp.pop %v1251
    %v1254 = vmul.f32 %v1243, %v1252
    %v1255 = vmul.f32 %v1245, %v1253
    %1256 = vrot.lane.b32.xlu0 %v1043, 56
    %v1257 = vpop.permute.xlu0 %1256
    %v1260 = vsel %vm210, %v1254, 0
    %1262 = vmatpush.msra.mxu0 0.0
    %1263 = vmatpush.msra.mxu0 0.0
    %1264 = vmatpush.msra.mxu0 0.0
    %1265 = vmatpush.msra.mxu0 0.0
    %1266 = vmatpush.msra.mxu0 0.0
    %1267 = vmatpush.msra.mxu0 0.0
    %1268 = vmatpush.msra.mxu0 0.0
    %1269 = vmatpush.msra.mxu0 0.0
    %1270 = vmatpush.msra.mxu0 0.0
    %1271 = vmatpush.msra.mxu0 0.0
    %1272 = vmatpush.msra.mxu0 0.0
    %1273 = vmatpush.msra.mxu0 0.0
    %1274 = vmatpush.msra.mxu0 0.0
    %1275 = vmatpush.msra.mxu0 0.0
    %1276 = vmatpush.msra.mxu0 0.0
    %1277 = vmatpush.msra.mxu0 %v1257
    %1278 = vmatmul.f32.gmra.mxu0 %v1260
    %v1279 = vpop.f32.mrf.mxu0
    %v1280 = vadd.f32 0.0, %v1279
    %1281 = vdwg.mxu0
    %1282 = vrot.lane.b32.xlu0 %v1046, 56
    %v1283 = vpop.permute.xlu0 %1282
    %v1286 = vsel %vm210, %v1255, 0
    %1288 = vmatpush.msra.mxu0 0.0
    %1289 = vmatpush.msra.mxu0 0.0
    %1290 = vmatpush.msra.mxu0 0.0
    %1291 = vmatpush.msra.mxu0 0.0
    %1292 = vmatpush.msra.mxu0 0.0
    %1293 = vmatpush.msra.mxu0 0.0
    %1294 = vmatpush.msra.mxu0 0.0
    %1295 = vmatpush.msra.mxu0 0.0
    %1296 = vmatpush.msra.mxu0 0.0
    %1297 = vmatpush.msra.mxu0 0.0
    %1298 = vmatpush.msra.mxu0 0.0
    %1299 = vmatpush.msra.mxu0 0.0
    %1300 = vmatpush.msra.mxu0 0.0
    %1301 = vmatpush.msra.mxu0 0.0
    %1302 = vmatpush.msra.mxu0 0.0
    %1303 = vmatpush.msra.mxu0 %v1283
    %1304 = vmatmul.f32.gmra.mxu0 %v1286
    %v1305 = vpop.f32.mrf.mxu0
    %v1306 = vadd.f32 0.0, %v1305
    %1307 = vdwg.mxu0
    %1310 = vrot.lane.b32.xlu0 %v1280, 8
    %v1311 = vpop.permute.xlu0 %1310
    %1312 = vrot.lane.b32.xlu0 %v1306, 8
    %v1313 = vpop.permute.xlu0 %1312
    %1316 = vst.msk [vmem:[#allocation3] sm:$0xff] %vm476, %v1311
    %1317 = vst.msk [vmem:[#allocation3 + $0x8] sm:$0xff] %vm476, %v1313
    %1318 = vrot.lane.b32.xlu0 %v1043, 112
    %v1319 = vpop.permute.xlu0 %1318
    %1320 = vrot.lane.b32.xlu0 %v1043, 80
    %v1321 = vpop.permute.xlu0 %1320
    %v1322 = vsel %vm210, %v1319, 0
    %v1324 = vsel %vm210, %v1321, 0
    %1326 = vmatpush.xpose.msra.mxu0 0.0
    %1327 = vmatpush.xpose.msra.mxu0 0.0
    %1328 = vmatpush.xpose.msra.mxu0 0.0
    %1329 = vmatpush.xpose.msra.mxu0 0.0
    %1330 = vmatpush.xpose.msra.mxu0 0.0
    %1331 = vmatpush.xpose.msra.mxu0 0.0
    %1332 = vmatpush.xpose.msra.mxu0 0.0
    %1333 = vmatpush.xpose.msra.mxu0 0.0
    %1334 = vmatpush.xpose.msra.mxu0 0.0
    %1335 = vmatpush.xpose.msra.mxu0 0.0
    %1336 = vmatpush.xpose.msra.mxu0 0.0
    %1337 = vmatpush.xpose.msra.mxu0 0.0
    %1338 = vmatpush.xpose.msra.mxu0 0.0
    %1339 = vmatpush.xpose.msra.mxu0 0.0
    %1340 = vmatpush.xpose.msra.mxu0 0.0
    %1341 = vmatpush.xpose.msra.mxu0 %v1324
    %1342 = vmatmul.f32.gmra.mxu0 %v1322
    %v1343 = vpop.f32.mrf.mxu0
    %v1344 = vadd.f32 0.0, %v1343
    %1345 = vdwg.mxu0
    %1346 = vrot.lane.b32.xlu0 %v1046, 112
    %v1347 = vpop.permute.xlu0 %1346
    %1348 = vrot.lane.b32.xlu0 %v1046, 80
    %v1349 = vpop.permute.xlu0 %1348
    %v1350 = vsel %vm210, %v1347, 0
    %v1352 = vsel %vm210, %v1349, 0
    %1354 = vmatpush.xpose.msra.mxu0 0.0
    %1355 = vmatpush.xpose.msra.mxu0 0.0
    %1356 = vmatpush.xpose.msra.mxu0 0.0
    %1357 = vmatpush.xpose.msra.mxu0 0.0
    %1358 = vmatpush.xpose.msra.mxu0 0.0
    %1359 = vmatpush.xpose.msra.mxu0 0.0
    %1360 = vmatpush.xpose.msra.mxu0 0.0
    %1361 = vmatpush.xpose.msra.mxu0 0.0
    %1362 = vmatpush.xpose.msra.mxu0 0.0
    %1363 = vmatpush.xpose.msra.mxu0 0.0
    %1364 = vmatpush.xpose.msra.mxu0 0.0
    %1365 = vmatpush.xpose.msra.mxu0 0.0
    %1366 = vmatpush.xpose.msra.mxu0 0.0
    %1367 = vmatpush.xpose.msra.mxu0 0.0
    %1368 = vmatpush.xpose.msra.mxu0 0.0
    %1369 = vmatpush.xpose.msra.mxu0 %v1352
    %1370 = vmatmul.f32.gmra.mxu0 %v1350
    %v1371 = vpop.f32.mrf.mxu0
    %v1372 = vadd.f32 0.0, %v1371
    %1373 = vdwg.mxu0
    %v1374 = vsel %vm210, %v1344, -inf
    %1375 = vmax.xlane.f32.xlu0 %v1374
    %v1376 = vpop.xlane.xlu0 %1375
    %v1377 = vsel %vm210, %v1372, -inf
    %1378 = vmax.xlane.f32.xlu0 %v1377
    %v1379 = vpop.xlane.xlu0 %1378
    %v1380 = vsub.f32 %v1344, %v1376
    %v1381 = vsub.f32 %v1372, %v1379
    %v1382 = vmul.f32 %v1380, 1.442695
    %v1383 = vpow.pop %v1382
    %v1384 = vmul.f32 %v1381, 1.442695
    %v1385 = vpow.pop %v1384
    %v1386 = vsel %vm210, %v1383, 0.0
    %1387 = vadd.xlane.f32.xlu0 %v1386
    %v1388 = vpop.xlane.xlu0 %1387
    %v1389 = vsel %vm210, %v1385, 0.0
    %1390 = vadd.xlane.f32.xlu0 %v1389
    %v1391 = vpop.xlane.xlu0 %1390
    %v1392 = vrcp.pop %v1388
    %v1393 = vrcp.pop %v1391
    %v1394 = vmul.f32 %v1383, %v1392
    %v1395 = vmul.f32 %v1385, %v1393
    %1396 = vrot.lane.b32.xlu0 %v1043, 48
    %v1397 = vpop.permute.xlu0 %1396
    %v1400 = vsel %vm210, %v1394, 0
    %1402 = vmatpush.msra.mxu0 0.0
    %1403 = vmatpush.msra.mxu0 0.0
    %1404 = vmatpush.msra.mxu0 0.0
    %1405 = vmatpush.msra.mxu0 0.0
    %1406 = vmatpush.msra.mxu0 0.0
    %1407 = vmatpush.msra.mxu0 0.0
    %1408 = vmatpush.msra.mxu0 0.0
    %1409 = vmatpush.msra.mxu0 0.0
    %1410 = vmatpush.msra.mxu0 0.0
    %1411 = vmatpush.msra.mxu0 0.0
    %1412 = vmatpush.msra.mxu0 0.0
    %1413 = vmatpush.msra.mxu0 0.0
    %1414 = vmatpush.msra.mxu0 0.0
    %1415 = vmatpush.msra.mxu0 0.0
    %1416 = vmatpush.msra.mxu0 0.0
    %1417 = vmatpush.msra.mxu0 %v1397
    %1418 = vmatmul.f32.gmra.mxu0 %v1400
    %v1419 = vpop.f32.mrf.mxu0
    %v1420 = vadd.f32 0.0, %v1419
    %1421 = vdwg.mxu0
    %1422 = vrot.lane.b32.xlu0 %v1046, 48
    %v1423 = vpop.permute.xlu0 %1422
    %v1426 = vsel %vm210, %v1395, 0
    %1428 = vmatpush.msra.mxu0 0.0
    %1429 = vmatpush.msra.mxu0 0.0
    %1430 = vmatpush.msra.mxu0 0.0
    %1431 = vmatpush.msra.mxu0 0.0
    %1432 = vmatpush.msra.mxu0 0.0
    %1433 = vmatpush.msra.mxu0 0.0
    %1434 = vmatpush.msra.mxu0 0.0
    %1435 = vmatpush.msra.mxu0 0.0
    %1436 = vmatpush.msra.mxu0 0.0
    %1437 = vmatpush.msra.mxu0 0.0
    %1438 = vmatpush.msra.mxu0 0.0
    %1439 = vmatpush.msra.mxu0 0.0
    %1440 = vmatpush.msra.mxu0 0.0
    %1441 = vmatpush.msra.mxu0 0.0
    %1442 = vmatpush.msra.mxu0 0.0
    %1443 = vmatpush.msra.mxu0 %v1423
    %1444 = vmatmul.f32.gmra.mxu0 %v1426
    %v1445 = vpop.f32.mrf.mxu0
    %v1446 = vadd.f32 0.0, %v1445
    %1447 = vdwg.mxu0
    %1450 = vrot.lane.b32.xlu0 %v1420, 16
    %v1451 = vpop.permute.xlu0 %1450
    %1452 = vrot.lane.b32.xlu0 %v1446, 16
    %v1453 = vpop.permute.xlu0 %1452
    %1456 = vst.msk [vmem:[#allocation3] sm:$0xff] %vm617, %v1451
    %1457 = vst.msk [vmem:[#allocation3 + $0x8] sm:$0xff] %vm617, %v1453
    %1458 = vrot.lane.b32.xlu0 %v1043, 104
    %v1459 = vpop.permute.xlu0 %1458
    %1460 = vrot.lane.b32.xlu0 %v1043, 72
    %v1461 = vpop.permute.xlu0 %1460
    %v1462 = vsel %vm210, %v1459, 0
    %v1464 = vsel %vm210, %v1461, 0
    %1466 = vmatpush.xpose.msra.mxu0 0.0
    %1467 = vmatpush.xpose.msra.mxu0 0.0
    %1468 = vmatpush.xpose.msra.mxu0 0.0
    %1469 = vmatpush.xpose.msra.mxu0 0.0
    %1470 = vmatpush.xpose.msra.mxu0 0.0
    %1471 = vmatpush.xpose.msra.mxu0 0.0
    %1472 = vmatpush.xpose.msra.mxu0 0.0
    %1473 = vmatpush.xpose.msra.mxu0 0.0
    %1474 = vmatpush.xpose.msra.mxu0 0.0
    %1475 = vmatpush.xpose.msra.mxu0 0.0
    %1476 = vmatpush.xpose.msra.mxu0 0.0
    %1477 = vmatpush.xpose.msra.mxu0 0.0
    %1478 = vmatpush.xpose.msra.mxu0 0.0
    %1479 = vmatpush.xpose.msra.mxu0 0.0
    %1480 = vmatpush.xpose.msra.mxu0 0.0
    %1481 = vmatpush.xpose.msra.mxu0 %v1464
    %1482 = vmatmul.f32.gmra.mxu0 %v1462
    %v1483 = vpop.f32.mrf.mxu0
    %v1484 = vadd.f32 0.0, %v1483
    %1485 = vdwg.mxu0
    %1486 = vrot.lane.b32.xlu0 %v1046, 104
    %v1487 = vpop.permute.xlu0 %1486
    %1488 = vrot.lane.b32.xlu0 %v1046, 72
    %v1489 = vpop.permute.xlu0 %1488
    %v1490 = vsel %vm210, %v1487, 0
    %v1492 = vsel %vm210, %v1489, 0
    %1494 = vmatpush.xpose.msra.mxu0 0.0
    %1495 = vmatpush.xpose.msra.mxu0 0.0
    %1496 = vmatpush.xpose.msra.mxu0 0.0
    %1497 = vmatpush.xpose.msra.mxu0 0.0
    %1498 = vmatpush.xpose.msra.mxu0 0.0
    %1499 = vmatpush.xpose.msra.mxu0 0.0
    %1500 = vmatpush.xpose.msra.mxu0 0.0
    %1501 = vmatpush.xpose.msra.mxu0 0.0
    %1502 = vmatpush.xpose.msra.mxu0 0.0
    %1503 = vmatpush.xpose.msra.mxu0 0.0
    %1504 = vmatpush.xpose.msra.mxu0 0.0
    %1505 = vmatpush.xpose.msra.mxu0 0.0
    %1506 = vmatpush.xpose.msra.mxu0 0.0
    %1507 = vmatpush.xpose.msra.mxu0 0.0
    %1508 = vmatpush.xpose.msra.mxu0 0.0
    %1509 = vmatpush.xpose.msra.mxu0 %v1492
    %1510 = vmatmul.f32.gmra.mxu0 %v1490
    %v1511 = vpop.f32.mrf.mxu0
    %v1512 = vadd.f32 0.0, %v1511
    %1513 = vdwg.mxu0
    %v1514 = vsel %vm210, %v1484, -inf
    %1515 = vmax.xlane.f32.xlu0 %v1514
    %v1516 = vpop.xlane.xlu0 %1515
    %v1517 = vsel %vm210, %v1512, -inf
    %1518 = vmax.xlane.f32.xlu0 %v1517
    %v1519 = vpop.xlane.xlu0 %1518
    %v1520 = vsub.f32 %v1484, %v1516
    %v1521 = vsub.f32 %v1512, %v1519
    %v1522 = vmul.f32 %v1520, 1.442695
    %v1523 = vpow.pop %v1522
    %v1524 = vmul.f32 %v1521, 1.442695
    %v1525 = vpow.pop %v1524
    %v1526 = vsel %vm210, %v1523, 0.0
    %1527 = vadd.xlane.f32.xlu0 %v1526
    %v1528 = vpop.xlane.xlu0 %1527
    %v1529 = vsel %vm210, %v1525, 0.0
    %1530 = vadd.xlane.f32.xlu0 %v1529
    %v1531 = vpop.xlane.xlu0 %1530
    %v1532 = vrcp.pop %v1528
    %v1533 = vrcp.pop %v1531
    %v1534 = vmul.f32 %v1523, %v1532
    %v1535 = vmul.f32 %v1525, %v1533
    %1536 = vrot.lane.b32.xlu0 %v1043, 40
    %v1537 = vpop.permute.xlu0 %1536
    %v1540 = vsel %vm210, %v1534, 0
    %1542 = vmatpush.msra.mxu0 0.0
    %1543 = vmatpush.msra.mxu0 0.0
    %1544 = vmatpush.msra.mxu0 0.0
    %1545 = vmatpush.msra.mxu0 0.0
    %1546 = vmatpush.msra.mxu0 0.0
    %1547 = vmatpush.msra.mxu0 0.0
    %1548 = vmatpush.msra.mxu0 0.0
    %1549 = vmatpush.msra.mxu0 0.0
    %1550 = vmatpush.msra.mxu0 0.0
    %1551 = vmatpush.msra.mxu0 0.0
    %1552 = vmatpush.msra.mxu0 0.0
    %1553 = vmatpush.msra.mxu0 0.0
    %1554 = vmatpush.msra.mxu0 0.0
    %1555 = vmatpush.msra.mxu0 0.0
    %1556 = vmatpush.msra.mxu0 0.0
    %1557 = vmatpush.msra.mxu0 %v1537
    %1558 = vmatmul.f32.gmra.mxu0 %v1540
    %v1559 = vpop.f32.mrf.mxu0
    %v1560 = vadd.f32 0.0, %v1559
    %1561 = vdwg.mxu0
    %1562 = vrot.lane.b32.xlu0 %v1046, 40
    %v1563 = vpop.permute.xlu0 %1562
    %v1566 = vsel %vm210, %v1535, 0
    %1568 = vmatpush.msra.mxu0 0.0
    %1569 = vmatpush.msra.mxu0 0.0
    %1570 = vmatpush.msra.mxu0 0.0
    %1571 = vmatpush.msra.mxu0 0.0
    %1572 = vmatpush.msra.mxu0 0.0
    %1573 = vmatpush.msra.mxu0 0.0
    %1574 = vmatpush.msra.mxu0 0.0
    %1575 = vmatpush.msra.mxu0 0.0
    %1576 = vmatpush.msra.mxu0 0.0
    %1577 = vmatpush.msra.mxu0 0.0
    %1578 = vmatpush.msra.mxu0 0.0
    %1579 = vmatpush.msra.mxu0 0.0
    %1580 = vmatpush.msra.mxu0 0.0
    %1581 = vmatpush.msra.mxu0 0.0
    %1582 = vmatpush.msra.mxu0 0.0
    %1583 = vmatpush.msra.mxu0 %v1563
    %1584 = vmatmul.f32.gmra.mxu0 %v1566
    %v1585 = vpop.f32.mrf.mxu0
    %v1586 = vadd.f32 0.0, %v1585
    %1587 = vdwg.mxu0
    %1590 = vrot.lane.b32.xlu0 %v1560, 24
    %v1591 = vpop.permute.xlu0 %1590
    %1592 = vrot.lane.b32.xlu0 %v1586, 24
    %v1593 = vpop.permute.xlu0 %1592
    %1596 = vst.msk [vmem:[#allocation3] sm:$0xff] %vm758, %v1591
    %1597 = vst.msk [vmem:[#allocation3 + $0x8] sm:$0xff] %vm758, %v1593
    %v1598 = vld [vmem:[#allocation3] sm:$0xff]
    %v1599 = vld [vmem:[#allocation3 + $0x8] sm:$0xff]
    %v1600 = vld [vmem:[%s2 + $0xb] sm:$0x1]
    %v1601 = vperm.slane %v1600, 0
    %1606 = vrot.lane.b32.xlu0 %v1000, 32
    %v1607 = vpop.permute.xlu0 %1606
    %1608 = vrot.lane.b32.xlu0 %v1002, 32
    %v1609 = vpop.permute.xlu0 %1608
    %1610 = vrot.lane.b32.xlu0 %v1004, 32
    %v1611 = vpop.permute.xlu0 %1610
    %1612 = vrot.lane.b32.xlu0 %v1006, 32
    %v1613 = vpop.permute.xlu0 %1612
    %v1619 = vsel %vm102, %v1598, 0
    %v1622 = vsel %vm102, %v1599, 0
    %1624 = vmatpush.msra.mxu0 0.0
    %1625 = vmatpush.msra.mxu0 0.0
    %1626 = vmatpush.msra.mxu0 0.0
    %1627 = vmatpush.msra.mxu0 0.0
    %1628 = vmatpush.msra.mxu0 0.0
    %1629 = vmatpush.msra.mxu0 0.0
    %1630 = vmatpush.msra.mxu0 0.0
    %1631 = vmatpush.msra.mxu0 0.0
    %1632 = vmatpush.msra.mxu0 0.0
    %1633 = vmatpush.msra.mxu0 0.0
    %1634 = vmatpush.msra.mxu0 0.0
    %1635 = vmatpush.msra.mxu0 0.0
    %1636 = vmatpush.msra.mxu0 %v1613
    %1637 = vmatpush.msra.mxu0 %v1611
    %1638 = vmatpush.msra.mxu0 %v1609
    %1639 = vmatpush.msra.mxu0 %v1607
    %1640 = vmatmul.f32.gmra.mxu0 %v1619
    %v1641 = vpop.f32.mrf.mxu0
    %v1642 = vadd.f32 %v1601, %v1641
    %1643 = vmatmul.f32.gmra.mxu0 %v1622
    %v1644 = vpop.f32.mrf.mxu0
    %v1645 = vadd.f32 %v1601, %v1644
    %1646 = vdwg.mxu0
    %v1647 = vadd.f32 %v1642, %v997
    %v1648 = vadd.f32 %v1645, %v998
    %v1649 = vld [vmem:[%s2 + $0xc] sm:$0x1]
    %v1650 = vld [vmem:[%s2 + $0xd] sm:$0x1]
    %v1651 = vsel %vm102, %v1647, 0.0
    %1652 = vadd.xlane.f32.xlu0 %v1651
    %v1653 = vpop.xlane.xlu0 %1652
    %v1654 = vsel %vm102, %v1648, 0.0
    %1655 = vadd.xlane.f32.xlu0 %v1654
    %v1656 = vpop.xlane.xlu0 %1655
    %v1657 = vmul.f32 %v1653, %v115
    %v1658 = vmul.f32 %v1656, %v115
    %v1659 = vsub.f32 %v1647, %v1657
    %v1660 = vsub.f32 %v1648, %v1658
    %v1661 = vmul.f32 %v1659, %v1659
    %v1662 = vmul.f32 %v1660, %v1660
    %v1663 = vsel %vm102, %v1661, 0.0
    %1664 = vadd.xlane.f32.xlu0 %v1663
    %v1665 = vpop.xlane.xlu0 %1664
    %v1666 = vsel %vm102, %v1662, 0.0
    %1667 = vadd.xlane.f32.xlu0 %v1666
    %v1668 = vpop.xlane.xlu0 %1667
    %v1669 = vmul.f32 %v1665, %v115
    %v1670 = vmul.f32 %v1668, %v115
    %v1671 = vadd.f32 %v1669, 1e-12
    %v1672 = vadd.f32 %v1670, 1e-12
    %v1673 = vrsqrt.pop %v1671
    %v1674 = vmul.f32 %v1673, %v1671
    %v1675 = vmul.f32 %v1674, %v1673
    %v1676 = vmul.f32 0.5, %v1675
    %v1677 = vsub.f32 1.5, %v1676
    %v1678 = vmul.f32 %v1673, %v1677
    %vm1679 = vweird.f32 %v1671
    %vm1680 = vweird.f32 %v1673
    %vm1681 = vmor %vm1679, %vm1680
    %v1682 = vsel %vm1681, %v1673, %v1678
    %v1683 = vrsqrt.pop %v1672
    %v1684 = vmul.f32 %v1683, %v1672
    %v1685 = vmul.f32 %v1684, %v1683
    %v1686 = vmul.f32 0.5, %v1685
    %v1687 = vsub.f32 1.5, %v1686
    %v1688 = vmul.f32 %v1683, %v1687
    %vm1689 = vweird.f32 %v1672
    %vm1690 = vweird.f32 %v1683
    %vm1691 = vmor %vm1689, %vm1690
    %v1692 = vsel %vm1691, %v1683, %v1688
    %v1693 = vmul.f32 %v1659, %v1682
    %v1694 = vmul.f32 %v1660, %v1692
    %v1695 = vperm.slane %v1649, 0
    %v1696 = vmul.f32 %v1693, %v1695
    %v1697 = vmul.f32 %v1694, %v1695
    %v1698 = vperm.slane %v1650, 0
    %v1699 = vadd.f32 %v1696, %v1698
    %v1700 = vadd.f32 %v1697, %v1698
    %v1701 = vld [vmem:[%s2 + $0xe] sm:$0x1]
    %v1702 = vperm.slane %v1701, 0
    %v1704 = vsel %vm102, %v1699, 0
    %v1707 = vsel %vm102, %v1700, 0
    %1709 = vmatpush.msra.mxu0 0.0
    %1710 = vmatpush.msra.mxu0 0.0
    %1711 = vmatpush.msra.mxu0 0.0
    %1712 = vmatpush.msra.mxu0 0.0
    %1713 = vmatpush.msra.mxu0 0.0
    %1714 = vmatpush.msra.mxu0 0.0
    %1715 = vmatpush.msra.mxu0 0.0
    %1716 = vmatpush.msra.mxu0 0.0
    %1717 = vmatpush.msra.mxu0 0.0
    %1718 = vmatpush.msra.mxu0 0.0
    %1719 = vmatpush.msra.mxu0 0.0
    %1720 = vmatpush.msra.mxu0 0.0
    %1721 = vmatpush.msra.mxu0 %v1007
    %1722 = vmatpush.msra.mxu0 %v1005
    %1723 = vmatpush.msra.mxu0 %v1003
    %1724 = vmatpush.msra.mxu0 %v1001
    %1725 = vmatmul.f32.gmra.mxu0 %v1704
    %v1726 = vpop.f32.mrf.mxu0
    %v1727 = vadd.f32 %v1702, %v1726
    %1728 = vmatmul.f32.gmra.mxu0 %v1707
    %v1729 = vpop.f32.mrf.mxu0
    %v1730 = vadd.f32 %v1702, %v1729
    %1731 = vdwg.mxu0
    %v1732 = vmul.f32 %v1727, 0.5
    %v1733 = vmul.f32 %v1730, 0.5
    %v1734 = vmul.f32 %v1727, 0.044715
    %v1735 = vmul.f32 %v1730, 0.044715
    %v1736 = vmul.f32 %v1734, %v1727
    %v1737 = vmul.f32 %v1735, %v1730
    %v1738 = vmul.f32 %v1736, %v1727
    %v1739 = vmul.f32 %v1737, %v1730
    %v1740 = vadd.f32 %v1727, %v1738
    %v1741 = vadd.f32 %v1730, %v1739
    %v1742 = vmul.f32 %v1740, 0.7978846
    %v1743 = vmul.f32 %v1741, 0.7978846
    %v1744 = vtanh.pop %v1742
    %v1745 = vtanh.pop %v1743
    %v1746 = vadd.f32 %v1744, 1.0
    %v1747 = vadd.f32 %v1745, 1.0
    %v1748 = vmul.f32 %v1732, %v1746
    %v1749 = vmul.f32 %v1733, %v1747
    %v1750 = vld [vmem:[%s2 + $0xf] sm:$0x1]
    %v1751 = vperm.slane %v1750, 0
    %v1753 = vsel %vm915, %v1748, 0
    %v1756 = vsel %vm915, %v1749, 0
    %1758 = vmatpush.msra.mxu0 0.0
    %1759 = vmatpush.msra.mxu0 0.0
    %1760 = vmatpush.msra.mxu0 0.0
    %1761 = vmatpush.msra.mxu0 0.0
    %1762 = vmatpush.msra.mxu0 0.0
    %1763 = vmatpush.msra.mxu0 0.0
    %1764 = vmatpush.msra.mxu0 0.0
    %1765 = vmatpush.msra.mxu0 0.0
    %1766 = vmatpush.msra.mxu0 %v1016
    %1767 = vmatpush.msra.mxu0 %v1015
    %1768 = vmatpush.msra.mxu0 %v1014
    %1769 = vmatpush.msra.mxu0 %v1013
    %1770 = vmatpush.msra.mxu0 %v1012
    %1771 = vmatpush.msra.mxu0 %v1011
    %1772 = vmatpush.msra.mxu0 %v1010
    %1773 = vmatpush.msra.mxu0 %v1009
    %1774 = vmatmul.f32.gmra.mxu0 %v1753
    %v1775 = vpop.f32.mrf.mxu0
    %v1776 = vadd.f32 %v1751, %v1775
    %1777 = vmatmul.f32.gmra.mxu0 %v1756
    %v1778 = vpop.f32.mrf.mxu0
    %v1779 = vadd.f32 %v1751, %v1778
    %1780 = vdwg.mxu0
    %v1781 = vadd.f32 %v1776, %v1699
    %v1782 = vadd.f32 %v1779, %v1700
    %v1783 = vld [vmem:[%s2 + $0x10] sm:$0x1]
    %v1784 = vld [vmem:[%s2 + $0x11] sm:$0x1]
    %v1785 = vsel %vm102, %v1781, 0.0
    %1786 = vadd.xlane.f32.xlu0 %v1785
    %v1787 = vpop.xlane.xlu0 %1786
    %v1788 = vsel %vm102, %v1782, 0.0
    %1789 = vadd.xlane.f32.xlu0 %v1788
    %v1790 = vpop.xlane.xlu0 %1789
    %v1791 = vmul.f32 %v1787, %v115
    %v1792 = vmul.f32 %v1790, %v115
    %v1793 = vsub.f32 %v1781, %v1791
    %v1794 = vsub.f32 %v1782, %v1792
    %v1795 = vmul.f32 %v1793, %v1793
    %v1796 = vmul.f32 %v1794, %v1794
    %v1797 = vsel %vm102, %v1795, 0.0
    %1798 = vadd.xlane.f32.xlu0 %v1797
    %v1799 = vpop.xlane.xlu0 %1798
    %v1800 = vsel %vm102, %v1796, 0.0
    %1801 = vadd.xlane.f32.xlu0 %v1800
    %v1802 = vpop.xlane.xlu0 %1801
    %v1803 = vmul.f32 %v1799, %v115
    %v1804 = vmul.f32 %v1802, %v115
    %v1805 = vadd.f32 %v1803, 1e-12
    %v1806 = vadd.f32 %v1804, 1e-12
    %v1807 = vrsqrt.pop %v1805
    %v1808 = vmul.f32 %v1807, %v1805
    %v1809 = vmul.f32 %v1808, %v1807
    %v1810 = vmul.f32 0.5, %v1809
    %v1811 = vsub.f32 1.5, %v1810
    %v1812 = vmul.f32 %v1807, %v1811
    %vm1813 = vweird.f32 %v1805
    %vm1814 = vweird.f32 %v1807
    %vm1815 = vmor %vm1813, %vm1814
    %v1816 = vsel %vm1815, %v1807, %v1812
    %v1817 = vrsqrt.pop %v1806
    %v1818 = vmul.f32 %v1817, %v1806
    %v1819 = vmul.f32 %v1818, %v1817
    %v1820 = vmul.f32 0.5, %v1819
    %v1821 = vsub.f32 1.5, %v1820
    %v1822 = vmul.f32 %v1817, %v1821
    %vm1823 = vweird.f32 %v1806
    %vm1824 = vweird.f32 %v1817
    %vm1825 = vmor %vm1823, %vm1824
    %v1826 = vsel %vm1825, %v1817, %v1822
    %v1827 = vmul.f32 %v1793, %v1816
    %v1828 = vmul.f32 %v1794, %v1826
    %v1829 = vperm.slane %v1783, 0
    %v1830 = vmul.f32 %v1827, %v1829
    %v1831 = vmul.f32 %v1828, %v1829
    %v1832 = vperm.slane %v1784, 0
    %v1833 = vadd.f32 %v1830, %v1832
    %v1834 = vadd.f32 %v1831, %v1832
    %v1836 = vrot.slane %v1834, 7
    %vm1838 = vcmask 1040384
    %v1839 = vsel %vm1838, %v1833, %v1836
    %v1840 = vld [vmem:[%s3 + $0x8] sm:$0xff]
    %v1841 = vld [vmem:[%s3 + $0x18] sm:$0xff]
    %v1842 = vld [vmem:[%s3 + $0x28] sm:$0xff]
    %v1843 = vld [vmem:[%s3 + $0x38] sm:$0xff]
    %v1844 = vld [vmem:[%s2 + $0x12] sm:$0x1]
    %v1845 = vperm.slane %v1844, 0
    %1850 = vrot.lane.b32.xlu0 %v1840, 64
    %v1851 = vpop.permute.xlu0 %1850
    %1852 = vrot.lane.b32.xlu0 %v1841, 64
    %v1853 = vpop.permute.xlu0 %1852
    %1854 = vrot.lane.b32.xlu0 %v1842, 64
    %v1855 = vpop.permute.xlu0 %1854
    %1856 = vrot.lane.b32.xlu0 %v1843, 64
    %v1857 = vpop.permute.xlu0 %1856
    %v1863 = vsel %vm102, %v1839, 0
    %1865 = vmatpush.msra.mxu0 0.0
    %1866 = vmatpush.msra.mxu0 0.0
    %1867 = vmatpush.msra.mxu0 0.0
    %1868 = vmatpush.msra.mxu0 0.0
    %1869 = vmatpush.msra.mxu0 0.0
    %1870 = vmatpush.msra.mxu0 0.0
    %1871 = vmatpush.msra.mxu0 0.0
    %1872 = vmatpush.msra.mxu0 0.0
    %1873 = vmatpush.msra.mxu0 0.0
    %1874 = vmatpush.msra.mxu0 0.0
    %1875 = vmatpush.msra.mxu0 0.0
    %1876 = vmatpush.msra.mxu0 0.0
    %1877 = vmatpush.msra.mxu0 %v1857
    %1878 = vmatpush.msra.mxu0 %v1855
    %1879 = vmatpush.msra.mxu0 %v1853
    %1880 = vmatpush.msra.mxu0 %v1851
    %1881 = vmatmul.f32.gmra.mxu0 %v1863
    %v1882 = vpop.f32.mrf.mxu0
    %v1883 = vadd.f32 %v1845, %v1882
    %1884 = vdwg.mxu0
    %v1885 = vtanh.pop %v1883
    %vm1886 = vcmask 254976
    %1887 = vst.msk [vmem:[#allocation6] sm:$0x3] %vm1886, %v1885
    // Predicated region
    $region18: #{bert_pre1_forward.1} parent=1 // pred_check
      _
    $region19: #{bert_pre1_forward.1} parent=1 // pred_check_branch
      %1889 = sbr.rel (0) target = $region21
    $region20: #{bert_pre1_forward.1} parent=1 // pred_region
      %1891 = vsyncadd [#allocation7], 0
      %s1893 = sshll.u32 [#allocation6], 4
      %s1894 = int_to_ptr.vmem [resolvable:$true] %s1893
      %s1895 = sshll.u32 %s5, 4
      %s1896 = int_to_ptr.hbm [resolvable:$true] %s1895
      %1898 = dma.vmem_to_hbm [thread:$0]  %s1894, 32, %s1896, [#allocation7]
    $region21: #{bert_pre1_forward.1} parent=1 // pred_fallthru
      _
    // Predicated region
    $region22: #{bert_pre1_forward.1} parent=1 // pred_check
      _
    $region23: #{bert_pre1_forward.1} parent=1 // pred_check_branch
      %1900 = sbr.rel (0) target = $region25
    $region24: #{bert_pre1_forward.1} parent=1 // pred_region
      %1902 = dma.done [#allocation7], 32
    $region25: #{bert_pre1_forward.1} parent=1 // pred_fallthru
      _
    %1903 = vsyncpa [#allocation7], 1

</llo_original>
